<compile_context>
chip_gen: v5e
topology: v5e:2x2
jax: 0.10.0
libtpu: 0.0.40
codegen_flags: <defaults>
</compile_context>

<pallas_src>
import functools

import jax
import jax.numpy as jnp
from jax import lax
from jax.experimental import pallas as pl
from jax.experimental.pallas import tpu as pltpu

LANE = 128        # TPU lane width; all feature dims are padded to this.
NEG_BIG = -1e30   # finite "mask" value baked into padded output-bias lanes.


def _pad_to(x, size, axis):
    pad = size - x.shape[axis]
    if pad <= 0:
        return x
    widths = [(0, 0)] * x.ndim
    widths[axis] = (0, pad)
    return jnp.pad(x, widths)


def rnn_seq_kernel(x_ref, h0_ref, w1_ref, b1_ref, w2_ref, b2_ref,
                   out_ref, newhid_ref, *, seq_len):
    """Whole-sequence RNN forward in a single kernel invocation.

    x_ref:      (T, B, 128) bf16  per-step input (lane padded); category folded into b1
    h0_ref:     (B, 128)    f32   initial hidden (lane padded)
    w1_ref:     (256, 256)  bf16  [W_input ; W_hidden] x [i2h | i2o]  (K, N) fused
    b1_ref:     (B, 256)    f32   i2h|i2o bias + per-sequence category contribution
    w2_ref:     (256, 128)  bf16  [W_o2o rows for h ; rows for o]
    b2_ref:     (B, 128)    f32   o2o bias; padded lanes hold -1e30 (mask baked in)
    out_ref:    (T, B, 128) f32   per-step log-probs
    newhid_ref: (B, 128)    f32   final hidden state
    """
    mm_dtype = w1_ref.dtype
    w1 = w1_ref[...]
    w2 = w2_ref[...]
    b1 = b1_ref[...]
    b2 = b2_ref[...]

    def step(t, carry):
        h_bf, _ = carry
        x_t = x_ref[t]                                    # (B, 128) bf16
        xin = jnp.concatenate([x_t, h_bf], axis=1)        # (B, 256) bf16, 128-lane aligned
        # Fused i2h + i2o: one full-K (256) MXU push, f32 accumulation -> [h' | o].
        ho = jnp.dot(xin, w1, preferred_element_type=jnp.float32) + b1    # (B, 256)
        ho_bf = ho.astype(mm_dtype)                        # single cast for both halves
        # Fused o2o: o2o(cat(h', o)) as one K=256 push (weights pre-split by rows).
        out = jnp.dot(ho_bf, w2, preferred_element_type=jnp.float32) + b2  # (B, 128)
        # Dropout(p=0.1) in eval mode -> identity.
        # LogSoftmax: padded lanes carry -1e30 from b2, so no explicit mask needed.
        m = jnp.max(out, axis=1, keepdims=True)
        z = out - m
        lse = jnp.log(jnp.sum(jnp.exp(z), axis=1, keepdims=True))
        out_ref[t] = (z - lse).astype(out_ref.dtype)
        # Hidden carry stays in vregs: bf16 copy feeds next step's matmul,
        # f32 copy is only consumed by the final newhid write.
        return ho_bf[:, :LANE], ho[:, :LANE]

    h0_f32 = h0_ref[...]
    _, h_final = lax.fori_loop(0, seq_len, step,
                               (h0_f32.astype(mm_dtype), h0_f32),
                               unroll=True)
    newhid_ref[...] = h_final


def init_params(key, n_note, input_size, hidden_size, output_size):
    """PyTorch-style logical parameters (weights stored as (in, out))."""
    comb = n_note + input_size + hidden_size
    hc = hidden_size + output_size
    ks = jax.random.split(key, 6)

    def linear(kw, kb, fan_in, fan_out):
        # PyTorch nn.Linear default init: U(-1/sqrt(fan_in), 1/sqrt(fan_in))
        bound = 1.0 / jnp.sqrt(jnp.float32(fan_in))
        w = jax.random.uniform(kw, (fan_in, fan_out), jnp.float32, -bound, bound)
        b = jax.random.uniform(kb, (fan_out,), jnp.float32, -bound, bound)
        return w, b

    w_i2h, b_i2h = linear(ks[0], ks[1], comb, hidden_size)
    w_i2o, b_i2o = linear(ks[2], ks[3], comb, output_size)
    w_o2o, b_o2o = linear(ks[4], ks[5], hc, output_size)
    return (w_i2h, b_i2h, w_i2o, b_i2o, w_o2o, b_o2o)


def pack_params(params, n_note, input_size, hidden_size, output_size,
                mm_dtype=jnp.bfloat16):
    """Fuse/split/pad the logical weights into the kernel layout (done once)."""
    w_i2h, b_i2h, w_i2o, b_i2o, w_o2o, b_o2o = params

    # Fuse i2h and i2o along the output dim at a 128-lane boundary -> (comb, 256).
    w_first = jnp.concatenate([_pad_to(w_i2h, LANE, 1),
                               _pad_to(w_i2o, LANE, 1)], axis=1)
    # Row split: category rows get folded into the bias on the host; input and
    # hidden rows are stacked into a single (256, 256) weight for one K=256 push.
    w_cat = w_first[:n_note].astype(mm_dtype)                          # (n_note, 256)
    w_in = _pad_to(w_first[n_note:n_note + input_size], LANE, 0)       # (128, 256)
    w_hid = _pad_to(w_first[n_note + input_size:], LANE, 0)            # (128, 256)
    w1 = jnp.concatenate([w_in, w_hid], axis=0).astype(mm_dtype)       # (256, 256)
    b_ho = jnp.concatenate([_pad_to(b_i2h, LANE, 0),
                            _pad_to(b_i2o, LANE, 0)]).astype(jnp.float32)  # (256,)

    # o2o split by rows (h part / o part) and stacked into one (256, 128) weight.
    w_oh = _pad_to(_pad_to(w_o2o[:hidden_size], LANE, 1), LANE, 0)     # (128, 128)
    w_oo = _pad_to(_pad_to(w_o2o[hidden_size:], LANE, 1), LANE, 0)     # (128, 128)
    w2 = jnp.concatenate([w_oh, w_oo], axis=0).astype(mm_dtype)        # (256, 128)

    # Bake the lane mask into the o2o bias: padded lanes get a large finite
    # negative so the in-kernel log-softmax needs no per-step masking.
    lane = jnp.arange(LANE)
    b2 = jnp.where(lane < output_size,
                   _pad_to(b_o2o, LANE, 0), NEG_BIG).astype(jnp.float32)  # (128,)

    return w_cat, w1, b_ho, w2, b2


def rnn_forward_seq(category, inputs_seq, h0, packed, *, output_size, hidden_size):
    """Run T recurrent steps in one fused pallas_call.

    category:   (B, n_note)        -- constant across the sequence
    inputs_seq: (T, B, input_size) -- per-step inputs
    h0:         (B, hidden_size)   -- initial hidden state
    Returns (log_probs (T, B, output_size), final_hidden (B, hidden_size)).
    """
    w_cat, w1, b_ho, w2, b2 = packed
    T, B = inputs_seq.shape[0], inputs_seq.shape[1]

    # Host-side prep (outside the hot loop): lane-pad the per-step inputs and
    # fold the sequence-constant category contribution into a per-sequence bias,
    # pre-broadcast so the in-kernel add is a plain vreg add every step.
    x_seq = _pad_to(inputs_seq, LANE, axis=-1).astype(w1.dtype)          # (T, B, 128)
    h0_p = _pad_to(h0, LANE, axis=-1).astype(jnp.float32)                # (B, 128)
    b1 = b_ho[None] + jnp.dot(category.astype(w_cat.dtype), w_cat,
                              preferred_element_type=jnp.float32)        # (B, 256)
    b2_b = jnp.broadcast_to(b2[None], (B, LANE))                         # (B, 128)

    def vmem():
        return pl.BlockSpec(memory_space=pltpu.MemorySpace.VMEM)

    out_full, newhid_full = pl.pallas_call(
        functools.partial(rnn_seq_kernel, seq_len=T),
        out_shape=(jax.ShapeDtypeStruct((T, B, LANE), jnp.float32),
                   jax.ShapeDtypeStruct((B, LANE), jnp.float32)),
        in_specs=[vmem() for _ in range(6)],
        out_specs=(vmem(), vmem()),
    )(x_seq, h0_p, w1, b1, w2, b2_b)

    return out_full[:, :, :output_size], newhid_full[:, :hidden_size]


if __name__ == "__main__":
    n_note = 8
    input_size = 16
    hidden_size = 32
    output_size = 16
    B = 16    # batch of independent sequences (fills a full (16,128) bf16 tile)
    T = 8     # sequence length, fully unrolled inside a single kernel launch

    key = jax.random.PRNGKey(0)
    k_cat, k_inp, k_par = jax.random.split(key, 3)

    category = jax.random.normal(k_cat, (B, n_note), jnp.float32)
    inputs_seq = jax.random.normal(k_inp, (T, B, input_size), jnp.float32)
    h0 = jnp.zeros((B, hidden_size), jnp.float32)   # initHidden()

    params = init_params(k_par, n_note, input_size, hidden_size, output_size)
    packed = pack_params(params, n_note, input_size, hidden_size, output_size)

    fwd = jax.jit(functools.partial(rnn_forward_seq,
                                    output_size=output_size,
                                    hidden_size=hidden_size))
    out, new_hidden = fwd(category, inputs_seq, h0, packed)
    jax.block_until_ready((out, new_hidden))

    # Pure-JAX reference with matching bf16 MXU operands / f32 accumulation.
    w_i2h, b_i2h, w_i2o, b_i2o, w_o2o, b_o2o = params
    bf = jnp.bfloat16

    def mm(a, w):
        return jnp.dot(a.astype(bf), w.astype(bf),
                       preferred_element_type=jnp.float32)

    h = h0
    refs = []
    for t in range(T):
        x = jnp.concatenate([category, inputs_seq[t], h], axis=1)
        h_new = mm(x, w_i2h) + b_i2h
        o_new = mm(x, w_i2o) + b_i2o
        oc = jnp.concatenate([h_new, o_new], axis=1)
        logits = mm(oc, w_o2o) + b_o2o
        refs.append(jax.nn.log_softmax(logits, axis=1))
        h = h_new
    ref_out = jnp.stack(refs)

    err_out = float(jnp.max(jnp.abs(out - ref_out)))
    err_hid = float(jnp.max(jnp.abs(new_hidden - h)))
    assert jnp.allclose(out, ref_out, atol=1e-2, rtol=1e-2), err_out
    assert jnp.allclose(new_hidden, h, atol=1e-2, rtol=1e-2), err_hid
    print("KERNEL_OK")
</pallas_src>

<mosaic_0001>
module attributes {stable_mosaic.version = 11 : i64} {
  func.func @rnn_seq_kernel(%arg0: memref<8x16x128xbf16, #tpu.memory_space<vmem>>, %arg1: memref<16x128xf32, #tpu.memory_space<vmem>>, %arg2: memref<256x256xbf16, #tpu.memory_space<vmem>>, %arg3: memref<16x256xf32, #tpu.memory_space<vmem>>, %arg4: memref<256x128xbf16, #tpu.memory_space<vmem>>, %arg5: memref<16x128xf32, #tpu.memory_space<vmem>>, %arg6: memref<8x16x128xf32, #tpu.memory_space<vmem>>, %arg7: memref<16x128xf32, #tpu.memory_space<vmem>>) attributes {dimension_semantics = [], scalar_prefetch = 0 : i64, scratch_operands = 0 : i64, tpu.core_type = #tpu.core_type<tc>} {
    %c0 = arith.constant 0 : index
    %c0_0 = arith.constant 0 : index
    %0 = vector.load %arg2[%c0, %c0_0] : memref<256x256xbf16, #tpu.memory_space<vmem>>, vector<256x256xbf16>
    %c0_1 = arith.constant 0 : index
    %c0_2 = arith.constant 0 : index
    %1 = vector.load %arg4[%c0_1, %c0_2] : memref<256x128xbf16, #tpu.memory_space<vmem>>, vector<256x128xbf16>
    %c0_3 = arith.constant 0 : index
    %c0_4 = arith.constant 0 : index
    %2 = vector.load %arg3[%c0_3, %c0_4] : memref<16x256xf32, #tpu.memory_space<vmem>>, vector<16x256xf32>
    %c0_5 = arith.constant 0 : index
    %c0_6 = arith.constant 0 : index
    %3 = vector.load %arg5[%c0_5, %c0_6] : memref<16x128xf32, #tpu.memory_space<vmem>>, vector<16x128xf32>
    %c0_7 = arith.constant 0 : index
    %c0_8 = arith.constant 0 : index
    %4 = vector.load %arg1[%c0_7, %c0_8] : memref<16x128xf32, #tpu.memory_space<vmem>>, vector<16x128xf32>
    %5 = arith.truncf %4 : vector<16x128xf32> to vector<16x128xbf16>
    %c0_i32 = arith.constant 0 : i32
    %6 = arith.index_cast %c0_i32 : i32 to index
    %c0_9 = arith.constant 0 : index
    %c0_10 = arith.constant 0 : index
    %7 = vector.load %arg0[%6, %c0_9, %c0_10] : memref<8x16x128xbf16, #tpu.memory_space<vmem>>, vector<1x16x128xbf16>
    %8 = vector.shape_cast %7 : vector<1x16x128xbf16> to vector<16x128xbf16>
    %9 = tpu.concatenate %8, %5 in 1 : vector<16x128xbf16>, vector<16x128xbf16> -> vector<16x256xbf16>
    %cst = arith.constant dense<0.000000e+00> : vector<16x256xf32>
    %10 = tpu.matmul %9, %0, %cst {dimension_numbers = #tpu.dot_dimension_numbers<[1], [0], [0], [1], [0, 0, 1, 1], [], []>} : vector<16x256xbf16>, vector<256x256xbf16>, vector<16x256xf32> -> vector<16x256xf32>
    %11 = arith.addf %10, %2 : vector<16x256xf32>
    %12 = arith.truncf %11 : vector<16x256xf32> to vector<16x256xbf16>
    %cst_11 = arith.constant dense<0.000000e+00> : vector<16x128xf32>
    %13 = tpu.matmul %12, %1, %cst_11 {dimension_numbers = #tpu.dot_dimension_numbers<[1], [0], [0], [1], [0, 0, 1, 1], [], []>} : vector<16x256xbf16>, vector<256x128xbf16>, vector<16x128xf32> -> vector<16x128xf32>
    %14 = arith.addf %13, %3 : vector<16x128xf32>
    %cst_12 = arith.constant dense<0xFF800000> : vector<16xf32>
    %15 = vector.multi_reduction <maximumf>, %14, %cst_12 [1] : vector<16x128xf32> to vector<16xf32>
    %16 = vector.shape_cast %15 : vector<16xf32> to vector<16x1xf32>
    %17 = vector.broadcast %16 : vector<16x1xf32> to vector<16x128xf32>
    %18 = arith.subf %14, %17 : vector<16x128xf32>
    %19 = math.exp %18 : vector<16x128xf32>
    %cst_13 = arith.constant dense<0.000000e+00> : vector<16xf32>
    %20 = vector.multi_reduction <add>, %19, %cst_13 [1] : vector<16x128xf32> to vector<16xf32>
    %21 = vector.shape_cast %20 : vector<16xf32> to vector<16x1xf32>
    %22 = math.log %21 : vector<16x1xf32>
    %23 = vector.broadcast %22 : vector<16x1xf32> to vector<16x128xf32>
    %24 = arith.subf %18, %23 : vector<16x128xf32>
    %25 = arith.index_cast %c0_i32 : i32 to index
    %c0_14 = arith.constant 0 : index
    %c0_15 = arith.constant 0 : index
    %26 = vector.load %arg6[%25, %c0_14, %c0_15] : memref<8x16x128xf32, #tpu.memory_space<vmem>>, vector<1x16x128xf32>
    %27 = vector.shape_cast %26 : vector<1x16x128xf32> to vector<16x128xf32>
    %28 = vector.shape_cast %24 : vector<16x128xf32> to vector<1x16x128xf32>
    tpu.vector_store %arg6[%25, %c0_14, %c0_15], %28 {strides = array<i32>} : memref<8x16x128xf32, #tpu.memory_space<vmem>>, vector<1x16x128xf32>,
    %29 = vector.extract_strided_slice %12 {offsets = [0, 0], sizes = [16, 128], strides = [1, 1]} : vector<16x256xbf16> to vector<16x128xbf16>
    %30 = vector.extract_strided_slice %11 {offsets = [0, 0], sizes = [16, 128], strides = [1, 1]} : vector<16x256xf32> to vector<16x128xf32>
    %c1_i32 = arith.constant 1 : i32
    %31 = arith.index_cast %c1_i32 : i32 to index
    %c0_16 = arith.constant 0 : index
    %c0_17 = arith.constant 0 : index
    %32 = vector.load %arg0[%31, %c0_16, %c0_17] : memref<8x16x128xbf16, #tpu.memory_space<vmem>>, vector<1x16x128xbf16>
    %33 = vector.shape_cast %32 : vector<1x16x128xbf16> to vector<16x128xbf16>
    %34 = tpu.concatenate %33, %29 in 1 : vector<16x128xbf16>, vector<16x128xbf16> -> vector<16x256xbf16>
    %cst_18 = arith.constant dense<0.000000e+00> : vector<16x256xf32>
    %35 = tpu.matmul %34, %0, %cst_18 {dimension_numbers = #tpu.dot_dimension_numbers<[1], [0], [0], [1], [0, 0, 1, 1], [], []>} : vector<16x256xbf16>, vector<256x256xbf16>, vector<16x256xf32> -> vector<16x256xf32>
    %36 = arith.addf %35, %2 : vector<16x256xf32>
    %37 = arith.truncf %36 : vector<16x256xf32> to vector<16x256xbf16>
    %cst_19 = arith.constant dense<0.000000e+00> : vector<16x128xf32>
    %38 = tpu.matmul %37, %1, %cst_19 {dimension_numbers = #tpu.dot_dimension_numbers<[1], [0], [0], [1], [0, 0, 1, 1], [], []>} : vector<16x256xbf16>, vector<256x128xbf16>, vector<16x128xf32> -> vector<16x128xf32>
    %39 = arith.addf %38, %3 : vector<16x128xf32>
    %cst_20 = arith.constant dense<0xFF800000> : vector<16xf32>
    %40 = vector.multi_reduction <maximumf>, %39, %cst_20 [1] : vector<16x128xf32> to vector<16xf32>
    %41 = vector.shape_cast %40 : vector<16xf32> to vector<16x1xf32>
    %42 = vector.broadcast %41 : vector<16x1xf32> to vector<16x128xf32>
    %43 = arith.subf %39, %42 : vector<16x128xf32>
    %44 = math.exp %43 : vector<16x128xf32>
    %cst_21 = arith.constant dense<0.000000e+00> : vector<16xf32>
    %45 = vector.multi_reduction <add>, %44, %cst_21 [1] : vector<16x128xf32> to vector<16xf32>
    %46 = vector.shape_cast %45 : vector<16xf32> to vector<16x1xf32>
    %47 = math.log %46 : vector<16x1xf32>
    %48 = vector.broadcast %47 : vector<16x1xf32> to vector<16x128xf32>
    %49 = arith.subf %43, %48 : vector<16x128xf32>
    %50 = arith.index_cast %c1_i32 : i32 to index
    %c0_22 = arith.constant 0 : index
    %c0_23 = arith.constant 0 : index
    %51 = vector.load %arg6[%50, %c0_22, %c0_23] : memref<8x16x128xf32, #tpu.memory_space<vmem>>, vector<1x16x128xf32>
    %52 = vector.shape_cast %51 : vector<1x16x128xf32> to vector<16x128xf32>
    %53 = vector.shape_cast %49 : vector<16x128xf32> to vector<1x16x128xf32>
    tpu.vector_store %arg6[%50, %c0_22, %c0_23], %53 {strides = array<i32>} : memref<8x16x128xf32, #tpu.memory_space<vmem>>, vector<1x16x128xf32>,
    %54 = vector.extract_strided_slice %37 {offsets = [0, 0], sizes = [16, 128], strides = [1, 1]} : vector<16x256xbf16> to vector<16x128xbf16>
    %55 = vector.extract_strided_slice %36 {offsets = [0, 0], sizes = [16, 128], strides = [1, 1]} : vector<16x256xf32> to vector<16x128xf32>
    %c2_i32 = arith.constant 2 : i32
    %56 = arith.index_cast %c2_i32 : i32 to index
    %c0_24 = arith.constant 0 : index
    %c0_25 = arith.constant 0 : index
    %57 = vector.load %arg0[%56, %c0_24, %c0_25] : memref<8x16x128xbf16, #tpu.memory_space<vmem>>, vector<1x16x128xbf16>
    %58 = vector.shape_cast %57 : vector<1x16x128xbf16> to vector<16x128xbf16>
    %59 = tpu.concatenate %58, %54 in 1 : vector<16x128xbf16>, vector<16x128xbf16> -> vector<16x256xbf16>
    %cst_26 = arith.constant dense<0.000000e+00> : vector<16x256xf32>
    %60 = tpu.matmul %59, %0, %cst_26 {dimension_numbers = #tpu.dot_dimension_numbers<[1], [0], [0], [1], [0, 0, 1, 1], [], []>} : vector<16x256xbf16>, vector<256x256xbf16>, vector<16x256xf32> -> vector<16x256xf32>
    %61 = arith.addf %60, %2 : vector<16x256xf32>
    %62 = arith.truncf %61 : vector<16x256xf32> to vector<16x256xbf16>
    %cst_27 = arith.constant dense<0.000000e+00> : vector<16x128xf32>
    %63 = tpu.matmul %62, %1, %cst_27 {dimension_numbers = #tpu.dot_dimension_numbers<[1], [0], [0], [1], [0, 0, 1, 1], [], []>} : vector<16x256xbf16>, vector<256x128xbf16>, vector<16x128xf32> -> vector<16x128xf32>
    %64 = arith.addf %63, %3 : vector<16x128xf32>
    %cst_28 = arith.constant dense<0xFF800000> : vector<16xf32>
    %65 = vector.multi_reduction <maximumf>, %64, %cst_28 [1] : vector<16x128xf32> to vector<16xf32>
    %66 = vector.shape_cast %65 : vector<16xf32> to vector<16x1xf32>
    %67 = vector.broadcast %66 : vector<16x1xf32> to vector<16x128xf32>
    %68 = arith.subf %64, %67 : vector<16x128xf32>
    %69 = math.exp %68 : vector<16x128xf32>
    %cst_29 = arith.constant dense<0.000000e+00> : vector<16xf32>
    %70 = vector.multi_reduction <add>, %69, %cst_29 [1] : vector<16x128xf32> to vector<16xf32>
    %71 = vector.shape_cast %70 : vector<16xf32> to vector<16x1xf32>
    %72 = math.log %71 : vector<16x1xf32>
    %73 = vector.broadcast %72 : vector<16x1xf32> to vector<16x128xf32>
    %74 = arith.subf %68, %73 : vector<16x128xf32>
    %75 = arith.index_cast %c2_i32 : i32 to index
    %c0_30 = arith.constant 0 : index
    %c0_31 = arith.constant 0 : index
    %76 = vector.load %arg6[%75, %c0_30, %c0_31] : memref<8x16x128xf32, #tpu.memory_space<vmem>>, vector<1x16x128xf32>
    %77 = vector.shape_cast %76 : vector<1x16x128xf32> to vector<16x128xf32>
    %78 = vector.shape_cast %74 : vector<16x128xf32> to vector<1x16x128xf32>
    tpu.vector_store %arg6[%75, %c0_30, %c0_31], %78 {strides = array<i32>} : memref<8x16x128xf32, #tpu.memory_space<vmem>>, vector<1x16x128xf32>,
    %79 = vector.extract_strided_slice %62 {offsets = [0, 0], sizes = [16, 128], strides = [1, 1]} : vector<16x256xbf16> to vector<16x128xbf16>
    %80 = vector.extract_strided_slice %61 {offsets = [0, 0], sizes = [16, 128], strides = [1, 1]} : vector<16x256xf32> to vector<16x128xf32>
    %c3_i32 = arith.constant 3 : i32
    %81 = arith.index_cast %c3_i32 : i32 to index
    %c0_32 = arith.constant 0 : index
    %c0_33 = arith.constant 0 : index
    %82 = vector.load %arg0[%81, %c0_32, %c0_33] : memref<8x16x128xbf16, #tpu.memory_space<vmem>>, vector<1x16x128xbf16>
    %83 = vector.shape_cast %82 : vector<1x16x128xbf16> to vector<16x128xbf16>
    %84 = tpu.concatenate %83, %79 in 1 : vector<16x128xbf16>, vector<16x128xbf16> -> vector<16x256xbf16>
    %cst_34 = arith.constant dense<0.000000e+00> : vector<16x256xf32>
    %85 = tpu.matmul %84, %0, %cst_34 {dimension_numbers = #tpu.dot_dimension_numbers<[1], [0], [0], [1], [0, 0, 1, 1], [], []>} : vector<16x256xbf16>, vector<256x256xbf16>, vector<16x256xf32> -> vector<16x256xf32>
    %86 = arith.addf %85, %2 : vector<16x256xf32>
    %87 = arith.truncf %86 : vector<16x256xf32> to vector<16x256xbf16>
    %cst_35 = arith.constant dense<0.000000e+00> : vector<16x128xf32>
    %88 = tpu.matmul %87, %1, %cst_35 {dimension_numbers = #tpu.dot_dimension_numbers<[1], [0], [0], [1], [0, 0, 1, 1], [], []>} : vector<16x256xbf16>, vector<256x128xbf16>, vector<16x128xf32> -> vector<16x128xf32>
    %89 = arith.addf %88, %3 : vector<16x128xf32>
    %cst_36 = arith.constant dense<0xFF800000> : vector<16xf32>
    %90 = vector.multi_reduction <maximumf>, %89, %cst_36 [1] : vector<16x128xf32> to vector<16xf32>
    %91 = vector.shape_cast %90 : vector<16xf32> to vector<16x1xf32>
    %92 = vector.broadcast %91 : vector<16x1xf32> to vector<16x128xf32>
    %93 = arith.subf %89, %92 : vector<16x128xf32>
    %94 = math.exp %93 : vector<16x128xf32>
    %cst_37 = arith.constant dense<0.000000e+00> : vector<16xf32>
    %95 = vector.multi_reduction <add>, %94, %cst_37 [1] : vector<16x128xf32> to vector<16xf32>
    %96 = vector.shape_cast %95 : vector<16xf32> to vector<16x1xf32>
    %97 = math.log %96 : vector<16x1xf32>
    %98 = vector.broadcast %97 : vector<16x1xf32> to vector<16x128xf32>
    %99 = arith.subf %93, %98 : vector<16x128xf32>
    %100 = arith.index_cast %c3_i32 : i32 to index
    %c0_38 = arith.constant 0 : index
    %c0_39 = arith.constant 0 : index
    %101 = vector.load %arg6[%100, %c0_38, %c0_39] : memref<8x16x128xf32, #tpu.memory_space<vmem>>, vector<1x16x128xf32>
    %102 = vector.shape_cast %101 : vector<1x16x128xf32> to vector<16x128xf32>
    %103 = vector.shape_cast %99 : vector<16x128xf32> to vector<1x16x128xf32>
    tpu.vector_store %arg6[%100, %c0_38, %c0_39], %103 {strides = array<i32>} : memref<8x16x128xf32, #tpu.memory_space<vmem>>, vector<1x16x128xf32>,
    %104 = vector.extract_strided_slice %87 {offsets = [0, 0], sizes = [16, 128], strides = [1, 1]} : vector<16x256xbf16> to vector<16x128xbf16>
    %105 = vector.extract_strided_slice %86 {offsets = [0, 0], sizes = [16, 128], strides = [1, 1]} : vector<16x256xf32> to vector<16x128xf32>
    %c4_i32 = arith.constant 4 : i32
    %106 = arith.index_cast %c4_i32 : i32 to index
    %c0_40 = arith.constant 0 : index
    %c0_41 = arith.constant 0 : index
    %107 = vector.load %arg0[%106, %c0_40, %c0_41] : memref<8x16x128xbf16, #tpu.memory_space<vmem>>, vector<1x16x128xbf16>
    %108 = vector.shape_cast %107 : vector<1x16x128xbf16> to vector<16x128xbf16>
    %109 = tpu.concatenate %108, %104 in 1 : vector<16x128xbf16>, vector<16x128xbf16> -> vector<16x256xbf16>
    %cst_42 = arith.constant dense<0.000000e+00> : vector<16x256xf32>
    %110 = tpu.matmul %109, %0, %cst_42 {dimension_numbers = #tpu.dot_dimension_numbers<[1], [0], [0], [1], [0, 0, 1, 1], [], []>} : vector<16x256xbf16>, vector<256x256xbf16>, vector<16x256xf32> -> vector<16x256xf32>
    %111 = arith.addf %110, %2 : vector<16x256xf32>
    %112 = arith.truncf %111 : vector<16x256xf32> to vector<16x256xbf16>
    %cst_43 = arith.constant dense<0.000000e+00> : vector<16x128xf32>
    %113 = tpu.matmul %112, %1, %cst_43 {dimension_numbers = #tpu.dot_dimension_numbers<[1], [0], [0], [1], [0, 0, 1, 1], [], []>} : vector<16x256xbf16>, vector<256x128xbf16>, vector<16x128xf32> -> vector<16x128xf32>
    %114 = arith.addf %113, %3 : vector<16x128xf32>
    %cst_44 = arith.constant dense<0xFF800000> : vector<16xf32>
    %115 = vector.multi_reduction <maximumf>, %114, %cst_44 [1] : vector<16x128xf32> to vector<16xf32>
    %116 = vector.shape_cast %115 : vector<16xf32> to vector<16x1xf32>
    %117 = vector.broadcast %116 : vector<16x1xf32> to vector<16x128xf32>
    %118 = arith.subf %114, %117 : vector<16x128xf32>
    %119 = math.exp %118 : vector<16x128xf32>
    %cst_45 = arith.constant dense<0.000000e+00> : vector<16xf32>
    %120 = vector.multi_reduction <add>, %119, %cst_45 [1] : vector<16x128xf32> to vector<16xf32>
    %121 = vector.shape_cast %120 : vector<16xf32> to vector<16x1xf32>
    %122 = math.log %121 : vector<16x1xf32>
    %123 = vector.broadcast %122 : vector<16x1xf32> to vector<16x128xf32>
    %124 = arith.subf %118, %123 : vector<16x128xf32>
    %125 = arith.index_cast %c4_i32 : i32 to index
    %c0_46 = arith.constant 0 : index
    %c0_47 = arith.constant 0 : index
    %126 = vector.load %arg6[%125, %c0_46, %c0_47] : memref<8x16x128xf32, #tpu.memory_space<vmem>>, vector<1x16x128xf32>
    %127 = vector.shape_cast %126 : vector<1x16x128xf32> to vector<16x128xf32>
    %128 = vector.shape_cast %124 : vector<16x128xf32> to vector<1x16x128xf32>
    tpu.vector_store %arg6[%125, %c0_46, %c0_47], %128 {strides = array<i32>} : memref<8x16x128xf32, #tpu.memory_space<vmem>>, vector<1x16x128xf32>,
    %129 = vector.extract_strided_slice %112 {offsets = [0, 0], sizes = [16, 128], strides = [1, 1]} : vector<16x256xbf16> to vector<16x128xbf16>
    %130 = vector.extract_strided_slice %111 {offsets = [0, 0], sizes = [16, 128], strides = [1, 1]} : vector<16x256xf32> to vector<16x128xf32>
    %c5_i32 = arith.constant 5 : i32
    %131 = arith.index_cast %c5_i32 : i32 to index
    %c0_48 = arith.constant 0 : index
    %c0_49 = arith.constant 0 : index
    %132 = vector.load %arg0[%131, %c0_48, %c0_49] : memref<8x16x128xbf16, #tpu.memory_space<vmem>>, vector<1x16x128xbf16>
    %133 = vector.shape_cast %132 : vector<1x16x128xbf16> to vector<16x128xbf16>
    %134 = tpu.concatenate %133, %129 in 1 : vector<16x128xbf16>, vector<16x128xbf16> -> vector<16x256xbf16>
    %cst_50 = arith.constant dense<0.000000e+00> : vector<16x256xf32>
    %135 = tpu.matmul %134, %0, %cst_50 {dimension_numbers = #tpu.dot_dimension_numbers<[1], [0], [0], [1], [0, 0, 1, 1], [], []>} : vector<16x256xbf16>, vector<256x256xbf16>, vector<16x256xf32> -> vector<16x256xf32>
    %136 = arith.addf %135, %2 : vector<16x256xf32>
    %137 = arith.truncf %136 : vector<16x256xf32> to vector<16x256xbf16>
    %cst_51 = arith.constant dense<0.000000e+00> : vector<16x128xf32>
    %138 = tpu.matmul %137, %1, %cst_51 {dimension_numbers = #tpu.dot_dimension_numbers<[1], [0], [0], [1], [0, 0, 1, 1], [], []>} : vector<16x256xbf16>, vector<256x128xbf16>, vector<16x128xf32> -> vector<16x128xf32>
    %139 = arith.addf %138, %3 : vector<16x128xf32>
    %cst_52 = arith.constant dense<0xFF800000> : vector<16xf32>
    %140 = vector.multi_reduction <maximumf>, %139, %cst_52 [1] : vector<16x128xf32> to vector<16xf32>
    %141 = vector.shape_cast %140 : vector<16xf32> to vector<16x1xf32>
    %142 = vector.broadcast %141 : vector<16x1xf32> to vector<16x128xf32>
    %143 = arith.subf %139, %142 : vector<16x128xf32>
    %144 = math.exp %143 : vector<16x128xf32>
    %cst_53 = arith.constant dense<0.000000e+00> : vector<16xf32>
    %145 = vector.multi_reduction <add>, %144, %cst_53 [1] : vector<16x128xf32> to vector<16xf32>
    %146 = vector.shape_cast %145 : vector<16xf32> to vector<16x1xf32>
    %147 = math.log %146 : vector<16x1xf32>
    %148 = vector.broadcast %147 : vector<16x1xf32> to vector<16x128xf32>
    %149 = arith.subf %143, %148 : vector<16x128xf32>
    %150 = arith.index_cast %c5_i32 : i32 to index
    %c0_54 = arith.constant 0 : index
    %c0_55 = arith.constant 0 : index
    %151 = vector.load %arg6[%150, %c0_54, %c0_55] : memref<8x16x128xf32, #tpu.memory_space<vmem>>, vector<1x16x128xf32>
    %152 = vector.shape_cast %151 : vector<1x16x128xf32> to vector<16x128xf32>
    %153 = vector.shape_cast %149 : vector<16x128xf32> to vector<1x16x128xf32>
    tpu.vector_store %arg6[%150, %c0_54, %c0_55], %153 {strides = array<i32>} : memref<8x16x128xf32, #tpu.memory_space<vmem>>, vector<1x16x128xf32>,
    %154 = vector.extract_strided_slice %137 {offsets = [0, 0], sizes = [16, 128], strides = [1, 1]} : vector<16x256xbf16> to vector<16x128xbf16>
    %155 = vector.extract_strided_slice %136 {offsets = [0, 0], sizes = [16, 128], strides = [1, 1]} : vector<16x256xf32> to vector<16x128xf32>
    %c6_i32 = arith.constant 6 : i32
    %156 = arith.index_cast %c6_i32 : i32 to index
    %c0_56 = arith.constant 0 : index
    %c0_57 = arith.constant 0 : index
    %157 = vector.load %arg0[%156, %c0_56, %c0_57] : memref<8x16x128xbf16, #tpu.memory_space<vmem>>, vector<1x16x128xbf16>
    %158 = vector.shape_cast %157 : vector<1x16x128xbf16> to vector<16x128xbf16>
    %159 = tpu.concatenate %158, %154 in 1 : vector<16x128xbf16>, vector<16x128xbf16> -> vector<16x256xbf16>
    %cst_58 = arith.constant dense<0.000000e+00> : vector<16x256xf32>
    %160 = tpu.matmul %159, %0, %cst_58 {dimension_numbers = #tpu.dot_dimension_numbers<[1], [0], [0], [1], [0, 0, 1, 1], [], []>} : vector<16x256xbf16>, vector<256x256xbf16>, vector<16x256xf32> -> vector<16x256xf32>
    %161 = arith.addf %160, %2 : vector<16x256xf32>
    %162 = arith.truncf %161 : vector<16x256xf32> to vector<16x256xbf16>
    %cst_59 = arith.constant dense<0.000000e+00> : vector<16x128xf32>
    %163 = tpu.matmul %162, %1, %cst_59 {dimension_numbers = #tpu.dot_dimension_numbers<[1], [0], [0], [1], [0, 0, 1, 1], [], []>} : vector<16x256xbf16>, vector<256x128xbf16>, vector<16x128xf32> -> vector<16x128xf32>
    %164 = arith.addf %163, %3 : vector<16x128xf32>
    %cst_60 = arith.constant dense<0xFF800000> : vector<16xf32>
    %165 = vector.multi_reduction <maximumf>, %164, %cst_60 [1] : vector<16x128xf32> to vector<16xf32>
    %166 = vector.shape_cast %165 : vector<16xf32> to vector<16x1xf32>
    %167 = vector.broadcast %166 : vector<16x1xf32> to vector<16x128xf32>
    %168 = arith.subf %164, %167 : vector<16x128xf32>
    %169 = math.exp %168 : vector<16x128xf32>
    %cst_61 = arith.constant dense<0.000000e+00> : vector<16xf32>
    %170 = vector.multi_reduction <add>, %169, %cst_61 [1] : vector<16x128xf32> to vector<16xf32>
    %171 = vector.shape_cast %170 : vector<16xf32> to vector<16x1xf32>
    %172 = math.log %171 : vector<16x1xf32>
    %173 = vector.broadcast %172 : vector<16x1xf32> to vector<16x128xf32>
    %174 = arith.subf %168, %173 : vector<16x128xf32>
    %175 = arith.index_cast %c6_i32 : i32 to index
    %c0_62 = arith.constant 0 : index
    %c0_63 = arith.constant 0 : index
    %176 = vector.load %arg6[%175, %c0_62, %c0_63] : memref<8x16x128xf32, #tpu.memory_space<vmem>>, vector<1x16x128xf32>
    %177 = vector.shape_cast %176 : vector<1x16x128xf32> to vector<16x128xf32>
    %178 = vector.shape_cast %174 : vector<16x128xf32> to vector<1x16x128xf32>
    tpu.vector_store %arg6[%175, %c0_62, %c0_63], %178 {strides = array<i32>} : memref<8x16x128xf32, #tpu.memory_space<vmem>>, vector<1x16x128xf32>,
    %179 = vector.extract_strided_slice %162 {offsets = [0, 0], sizes = [16, 128], strides = [1, 1]} : vector<16x256xbf16> to vector<16x128xbf16>
    %180 = vector.extract_strided_slice %161 {offsets = [0, 0], sizes = [16, 128], strides = [1, 1]} : vector<16x256xf32> to vector<16x128xf32>
    %c7_i32 = arith.constant 7 : i32
    %181 = arith.index_cast %c7_i32 : i32 to index
    %c0_64 = arith.constant 0 : index
    %c0_65 = arith.constant 0 : index
    %182 = vector.load %arg0[%181, %c0_64, %c0_65] : memref<8x16x128xbf16, #tpu.memory_space<vmem>>, vector<1x16x128xbf16>
    %183 = vector.shape_cast %182 : vector<1x16x128xbf16> to vector<16x128xbf16>
    %184 = tpu.concatenate %183, %179 in 1 : vector<16x128xbf16>, vector<16x128xbf16> -> vector<16x256xbf16>
    %cst_66 = arith.constant dense<0.000000e+00> : vector<16x256xf32>
    %185 = tpu.matmul %184, %0, %cst_66 {dimension_numbers = #tpu.dot_dimension_numbers<[1], [0], [0], [1], [0, 0, 1, 1], [], []>} : vector<16x256xbf16>, vector<256x256xbf16>, vector<16x256xf32> -> vector<16x256xf32>
    %186 = arith.addf %185, %2 : vector<16x256xf32>
    %187 = arith.truncf %186 : vector<16x256xf32> to vector<16x256xbf16>
    %cst_67 = arith.constant dense<0.000000e+00> : vector<16x128xf32>
    %188 = tpu.matmul %187, %1, %cst_67 {dimension_numbers = #tpu.dot_dimension_numbers<[1], [0], [0], [1], [0, 0, 1, 1], [], []>} : vector<16x256xbf16>, vector<256x128xbf16>, vector<16x128xf32> -> vector<16x128xf32>
    %189 = arith.addf %188, %3 : vector<16x128xf32>
    %cst_68 = arith.constant dense<0xFF800000> : vector<16xf32>
    %190 = vector.multi_reduction <maximumf>, %189, %cst_68 [1] : vector<16x128xf32> to vector<16xf32>
    %191 = vector.shape_cast %190 : vector<16xf32> to vector<16x1xf32>
    %192 = vector.broadcast %191 : vector<16x1xf32> to vector<16x128xf32>
    %193 = arith.subf %189, %192 : vector<16x128xf32>
    %194 = math.exp %193 : vector<16x128xf32>
    %cst_69 = arith.constant dense<0.000000e+00> : vector<16xf32>
    %195 = vector.multi_reduction <add>, %194, %cst_69 [1] : vector<16x128xf32> to vector<16xf32>
    %196 = vector.shape_cast %195 : vector<16xf32> to vector<16x1xf32>
    %197 = math.log %196 : vector<16x1xf32>
    %198 = vector.broadcast %197 : vector<16x1xf32> to vector<16x128xf32>
    %199 = arith.subf %193, %198 : vector<16x128xf32>
    %200 = arith.index_cast %c7_i32 : i32 to index
    %c0_70 = arith.constant 0 : index
    %c0_71 = arith.constant 0 : index
    %201 = vector.load %arg6[%200, %c0_70, %c0_71] : memref<8x16x128xf32, #tpu.memory_space<vmem>>, vector<1x16x128xf32>
    %202 = vector.shape_cast %201 : vector<1x16x128xf32> to vector<16x128xf32>
    %203 = vector.shape_cast %199 : vector<16x128xf32> to vector<1x16x128xf32>
    tpu.vector_store %arg6[%200, %c0_70, %c0_71], %203 {strides = array<i32>} : memref<8x16x128xf32, #tpu.memory_space<vmem>>, vector<1x16x128xf32>,
    %204 = vector.extract_strided_slice %187 {offsets = [0, 0], sizes = [16, 128], strides = [1, 1]} : vector<16x256xbf16> to vector<16x128xbf16>
    %205 = vector.extract_strided_slice %186 {offsets = [0, 0], sizes = [16, 128], strides = [1, 1]} : vector<16x256xf32> to vector<16x128xf32>
    %c8_i32 = arith.constant 8 : i32
    %c0_72 = arith.constant 0 : index
    %c0_73 = arith.constant 0 : index
    %206 = vector.load %arg7[%c0_72, %c0_73] : memref<16x128xf32, #tpu.memory_space<vmem>>, vector<16x128xf32>
    tpu.vector_store %arg7[%c0_72, %c0_73], %205 {strides = array<i32>} : memref<16x128xf32, #tpu.memory_space<vmem>>, vector<16x128xf32>,
    return
  }
}

</mosaic_0001>

<llo_original>
// kernel: rnn_forward_seq.1
$region0: #{rnn_forward_seq.1}
  #allocation0 [shape = 'u32[]', space=smem, size = 0x4, offset = 0x4, fixed_abs, tag = 'smem constant byte address 0x4 - core index']
  #allocation1 [shape = 'u32[72,128]{1,0:T(1,128)}', space=vmem, size = 0x9000, scoped, tag = 'internal scratch']
  %s0 = inlined_call_operand.vmem [shape: bf16[8,16,128], index: 0, kind: input, shape index: {}]
  %s1 = inlined_call_operand.vmem [shape: f32[16,128], index: 1, kind: input, shape index: {}]
  %s2 = inlined_call_operand.vmem [shape: bf16[256,256], index: 2, kind: input, shape index: {}]
  %s3 = inlined_call_operand.vmem [shape: f32[16,256], index: 3, kind: input, shape index: {}]
  %s4 = inlined_call_operand.hbm [shape: bf16[256,128], index: 4, kind: input, shape index: {}]
  %s5 = inlined_call_operand.vmem [shape: f32[16,128], index: 5, kind: input, shape index: {}]
  %s6 = inlined_call_operand.hbm [shape: f32[8,16,128], index: 6, kind: output, shape index: {0}]
  %s7 = inlined_call_operand.hbm [shape: f32[16,128], index: 7, kind: output, shape index: {1}]
  %8 = xla_tuple %s6, %s7
  %s9 = sld [smem:[#allocation0]]
  $region46: #{rnn_forward_seq.1} parent=0
    _
  %s11 = ssub.s32 1, %s9
  %s12 = scalar_select 0, %s11, %s9
  $region1: #{rnn_forward_seq.1} parent=0
    #allocation2 [shape = 'u8[65536]{0}', space=vmem, size = 0x10000, scoped, tag = 'input window, operand 4, single buffered']
    #allocation3 [shape = 's32[1]{0}', space=sflag, size = 0x4, scoped, tag = 'scoped memory for rnn_forward_seq.1']
    #allocation4 [shape = 's32[1]{0}', space=sflag, size = 0x4, scoped, tag = 'scoped memory for rnn_forward_seq.1']
    #allocation5 [shape = 'u8[65536]{0}', space=vmem, size = 0x10000, scoped, tag = 'output window, operand 0, single buffered']
    #allocation6 [shape = 'u8[8192]{0}', space=vmem, size = 0x2000, scoped, tag = 'output window, operand 1, single buffered']
    #allocation7 [shape = 's32[1]{0}', space=sflag, size = 0x4, scoped, tag = 'scoped memory for rnn_forward_seq.1']
    %13 = vsyncpa [#allocation3], 0
    %14 = vsyncpa [#allocation4], 0
    %15 = vsyncpa [#allocation7], 0
    // Predicated region
    $region2: #{rnn_forward_seq.1} parent=1 // pred_check
      _
    $region3: #{rnn_forward_seq.1} parent=1 // pred_check_branch
      %17 = sbr.rel (0) target = $region5
    $region4: #{rnn_forward_seq.1} parent=1 // pred_region
      _
    $region5: #{rnn_forward_seq.1} parent=1 // pred_fallthru
      _
    // Predicated region
    $region6: #{rnn_forward_seq.1} parent=1 // pred_check
      _
    $region7: #{rnn_forward_seq.1} parent=1 // pred_check_branch
      %19 = sbr.rel (0) target = $region9
    $region8: #{rnn_forward_seq.1} parent=1 // pred_region
      _
    $region9: #{rnn_forward_seq.1} parent=1 // pred_fallthru
      _
    // Predicated region
    $region10: #{rnn_forward_seq.1} parent=1 // pred_check
      _
    $region11: #{rnn_forward_seq.1} parent=1 // pred_check_branch
      %21 = sbr.rel (0) target = $region13
    $region12: #{rnn_forward_seq.1} parent=1 // pred_region
      _
    $region13: #{rnn_forward_seq.1} parent=1 // pred_fallthru
      _
    // Predicated region
    $region14: #{rnn_forward_seq.1} parent=1 // pred_check
      _
    $region15: #{rnn_forward_seq.1} parent=1 // pred_check_branch
      %23 = sbr.rel (0) target = $region17
    $region16: #{rnn_forward_seq.1} parent=1 // pred_region
      _
    $region17: #{rnn_forward_seq.1} parent=1 // pred_fallthru
      _
    // Predicated region
    $region18: #{rnn_forward_seq.1} parent=1 // pred_check
      _
    $region19: #{rnn_forward_seq.1} parent=1 // pred_check_branch
      %25 = sbr.rel (0) target = $region21
    $region20: #{rnn_forward_seq.1} parent=1 // pred_region
      %27 = vsyncadd [#allocation3], 0
      %s28 = sshll.u32 %s4, 4
      %s29 = int_to_ptr.hbm [resolvable:$true] %s28
      %s30 = sshll.u32 [#allocation2], 4
      %s31 = int_to_ptr.vmem [resolvable:$true] %s30
      %36 = dma.hbm_to_vmem [thread:$0]  %s29, 2048, %s31, [#allocation3], 64, 64, 4
    $region21: #{rnn_forward_seq.1} parent=1 // pred_fallthru
      _
    // Predicated region
    $region22: #{rnn_forward_seq.1} parent=1 // pred_check
      _
    $region23: #{rnn_forward_seq.1} parent=1 // pred_check_branch
      %38 = sbr.rel (0) target = $region25
    $region24: #{rnn_forward_seq.1} parent=1 // pred_region
      _
    $region25: #{rnn_forward_seq.1} parent=1 // pred_fallthru
      _
    // Predicated region
    $region26: #{rnn_forward_seq.1} parent=1 // pred_check
      _
    $region27: #{rnn_forward_seq.1} parent=1 // pred_check_branch
      %40 = sbr.rel (0) target = $region29
    $region28: #{rnn_forward_seq.1} parent=1 // pred_region
      %42 = dma.done [#allocation3], 2048
    $region29: #{rnn_forward_seq.1} parent=1 // pred_fallthru
      _
    %v43 = vld [vmem:[%s2] sm:$0xff]
    %v44 = vld [vmem:[%s2 + $0x8] sm:$0xff]
    %v45 = vld [vmem:[%s2 + $0x10] sm:$0xff]
    %v46 = vld [vmem:[%s2 + $0x18] sm:$0xff]
    %v47 = vld [vmem:[%s2 + $0x20] sm:$0xff]
    %v48 = vld [vmem:[%s2 + $0x28] sm:$0xff]
    %v49 = vld [vmem:[%s2 + $0x30] sm:$0xff]
    %v50 = vld [vmem:[%s2 + $0x38] sm:$0xff]
    %v51 = vld [vmem:[%s2 + $0x40] sm:$0xff]
    %v52 = vld [vmem:[%s2 + $0x48] sm:$0xff]
    %v53 = vld [vmem:[%s2 + $0x50] sm:$0xff]
    %v54 = vld [vmem:[%s2 + $0x58] sm:$0xff]
    %v55 = vld [vmem:[%s2 + $0x60] sm:$0xff]
    %v56 = vld [vmem:[%s2 + $0x68] sm:$0xff]
    %v57 = vld [vmem:[%s2 + $0x70] sm:$0xff]
    %v58 = vld [vmem:[%s2 + $0x78] sm:$0xff]
    %v59 = vld [vmem:[%s2 + $0x80] sm:$0xff]
    %v60 = vld [vmem:[%s2 + $0x88] sm:$0xff]
    %v61 = vld [vmem:[%s2 + $0x90] sm:$0xff]
    %v62 = vld [vmem:[%s2 + $0x98] sm:$0xff]
    %v63 = vld [vmem:[%s2 + $0xa0] sm:$0xff]
    %v64 = vld [vmem:[%s2 + $0xa8] sm:$0xff]
    %v65 = vld [vmem:[%s2 + $0xb0] sm:$0xff]
    %v66 = vld [vmem:[%s2 + $0xb8] sm:$0xff]
    %v67 = vld [vmem:[%s2 + $0xc0] sm:$0xff]
    %v68 = vld [vmem:[%s2 + $0xc8] sm:$0xff]
    %v69 = vld [vmem:[%s2 + $0xd0] sm:$0xff]
    %v70 = vld [vmem:[%s2 + $0xd8] sm:$0xff]
    %v71 = vld [vmem:[%s2 + $0xe0] sm:$0xff]
    %v72 = vld [vmem:[%s2 + $0xe8] sm:$0xff]
    %v73 = vld [vmem:[%s2 + $0xf0] sm:$0xff]
    %v74 = vld [vmem:[%s2 + $0xf8] sm:$0xff]
    %v75 = vld [vmem:[#allocation2] sm:$0xf]
    %v76 = vld [vmem:[#allocation2 + $0x4] sm:$0xf]
    %v77 = vld [vmem:[#allocation2 + $0x8] sm:$0xf]
    %v78 = vld [vmem:[#allocation2 + $0xc] sm:$0xf]
    %v79 = vld [vmem:[#allocation2 + $0x10] sm:$0xf]
    %v80 = vld [vmem:[#allocation2 + $0x14] sm:$0xf]
    %v81 = vld [vmem:[#allocation2 + $0x18] sm:$0xf]
    %v82 = vld [vmem:[#allocation2 + $0x1c] sm:$0xf]
    %v83 = vld [vmem:[#allocation2 + $0x20] sm:$0xf]
    %v84 = vld [vmem:[#allocation2 + $0x24] sm:$0xf]
    %v85 = vld [vmem:[#allocation2 + $0x28] sm:$0xf]
    %v86 = vld [vmem:[#allocation2 + $0x2c] sm:$0xf]
    %v87 = vld [vmem:[#allocation2 + $0x30] sm:$0xf]
    %v88 = vld [vmem:[#allocation2 + $0x34] sm:$0xf]
    %v89 = vld [vmem:[#allocation2 + $0x38] sm:$0xf]
    %v90 = vld [vmem:[#allocation2 + $0x3c] sm:$0xf]
    %v91 = vld [vmem:[#allocation2 + $0x40] sm:$0xf]
    %v92 = vld [vmem:[#allocation2 + $0x44] sm:$0xf]
    %v93 = vld [vmem:[#allocation2 + $0x48] sm:$0xf]
    %v94 = vld [vmem:[#allocation2 + $0x4c] sm:$0xf]
    %v95 = vld [vmem:[#allocation2 + $0x50] sm:$0xf]
    %v96 = vld [vmem:[#allocation2 + $0x54] sm:$0xf]
    %v97 = vld [vmem:[#allocation2 + $0x58] sm:$0xf]
    %v98 = vld [vmem:[#allocation2 + $0x5c] sm:$0xf]
    %v99 = vld [vmem:[#allocation2 + $0x60] sm:$0xf]
    %v100 = vld [vmem:[#allocation2 + $0x64] sm:$0xf]
    %v101 = vld [vmem:[#allocation2 + $0x68] sm:$0xf]
    %v102 = vld [vmem:[#allocation2 + $0x6c] sm:$0xf]
    %v103 = vld [vmem:[#allocation2 + $0x70] sm:$0xf]
    %v104 = vld [vmem:[#allocation2 + $0x74] sm:$0xf]
    %v105 = vld [vmem:[#allocation2 + $0x78] sm:$0xf]
    %v106 = vld [vmem:[#allocation2 + $0x7c] sm:$0xf]
    %v107 = vld [vmem:[%s3] sm:$0xff]
    %v108 = vld [vmem:[%s3 + $0x8] sm:$0xff]
    %v109 = vld [vmem:[%s3 + $0x10] sm:$0xff]
    %v110 = vld [vmem:[%s3 + $0x18] sm:$0xff]
    %v111 = vld [vmem:[%s5] sm:$0xff]
    %v112 = vld [vmem:[%s5 + $0x8] sm:$0xff]
    %v113 = vld [vmem:[%s1] sm:$0xff]
    %v114 = vld [vmem:[%s1 + $0x8] sm:$0xff]
    %v115 = vpack.c.bf16 %v113, %v113
    %v116 = vpack.c.bf16 %v114, %v114
    %v117 = vld [vmem:[%s0] sm:$0xf]
    %v118 = vld [vmem:[%s0 + $0x4] sm:$0xf]
    %v121 = vunpack.c.l.b16 %v117
    %v122 = vunpack.c.l.b16 %v118
    %v123 = vpack.c.b16 %v122, %v121
    %v127 = vunpack.c.l.b16 %v115
    %v128 = vunpack.c.l.b16 %v116
    %v129 = vpack.c.b16 %v128, %v127
    %v163 = vunpack.c.l.b16 %v43
    %v164 = vunpack.c.h.b16 %v43
    %v165 = vunpack.c.l.b16 %v44
    %v166 = vunpack.c.h.b16 %v44
    %v167 = vunpack.c.l.b16 %v45
    %v168 = vunpack.c.h.b16 %v45
    %v169 = vunpack.c.l.b16 %v46
    %v170 = vunpack.c.h.b16 %v46
    %v171 = vunpack.c.l.b16 %v47
    %v172 = vunpack.c.h.b16 %v47
    %v173 = vunpack.c.l.b16 %v48
    %v174 = vunpack.c.h.b16 %v48
    %v175 = vunpack.c.l.b16 %v49
    %v176 = vunpack.c.h.b16 %v49
    %v177 = vunpack.c.l.b16 %v50
    %v178 = vunpack.c.h.b16 %v50
    %v179 = vunpack.c.l.b16 %v51
    %v180 = vunpack.c.h.b16 %v51
    %v181 = vunpack.c.l.b16 %v52
    %v182 = vunpack.c.h.b16 %v52
    %v183 = vunpack.c.l.b16 %v53
    %v184 = vunpack.c.h.b16 %v53
    %v185 = vunpack.c.l.b16 %v54
    %v186 = vunpack.c.h.b16 %v54
    %v187 = vunpack.c.l.b16 %v55
    %v188 = vunpack.c.h.b16 %v55
    %v189 = vunpack.c.l.b16 %v56
    %v190 = vunpack.c.h.b16 %v56
    %v191 = vunpack.c.l.b16 %v57
    %v192 = vunpack.c.h.b16 %v57
    %v193 = vunpack.c.l.b16 %v58
    %v194 = vunpack.c.h.b16 %v58
    %v195 = vunpack.c.l.b16 %v59
    %v196 = vunpack.c.h.b16 %v59
    %v197 = vunpack.c.l.b16 %v60
    %v198 = vunpack.c.h.b16 %v60
    %v199 = vunpack.c.l.b16 %v61
    %v200 = vunpack.c.h.b16 %v61
    %v201 = vunpack.c.l.b16 %v62
    %v202 = vunpack.c.h.b16 %v62
    %v203 = vunpack.c.l.b16 %v63
    %v204 = vunpack.c.h.b16 %v63
    %v205 = vunpack.c.l.b16 %v64
    %v206 = vunpack.c.h.b16 %v64
    %v207 = vunpack.c.l.b16 %v65
    %v208 = vunpack.c.h.b16 %v65
    %v209 = vunpack.c.l.b16 %v66
    %v210 = vunpack.c.h.b16 %v66
    %v211 = vunpack.c.l.b16 %v67
    %v212 = vunpack.c.h.b16 %v67
    %v213 = vunpack.c.l.b16 %v68
    %v214 = vunpack.c.h.b16 %v68
    %v215 = vunpack.c.l.b16 %v69
    %v216 = vunpack.c.h.b16 %v69
    %v217 = vunpack.c.l.b16 %v70
    %v218 = vunpack.c.h.b16 %v70
    %v219 = vunpack.c.l.b16 %v71
    %v220 = vunpack.c.h.b16 %v71
    %v221 = vunpack.c.l.b16 %v72
    %v222 = vunpack.c.h.b16 %v72
    %v223 = vunpack.c.l.b16 %v73
    %v224 = vunpack.c.h.b16 %v73
    %v225 = vunpack.c.l.b16 %v74
    %v226 = vunpack.c.h.b16 %v74
    %v227 = vpack.c.b16 %v165, %v163
    %v228 = vpack.c.b16 %v166, %v164
    %v229 = vpack.c.b16 %v169, %v167
    %v230 = vpack.c.b16 %v170, %v168
    %v231 = vpack.c.b16 %v173, %v171
    %v232 = vpack.c.b16 %v174, %v172
    %v233 = vpack.c.b16 %v177, %v175
    %v234 = vpack.c.b16 %v178, %v176
    %v235 = vpack.c.b16 %v181, %v179
    %v236 = vpack.c.b16 %v182, %v180
    %v237 = vpack.c.b16 %v185, %v183
    %v238 = vpack.c.b16 %v186, %v184
    %v239 = vpack.c.b16 %v189, %v187
    %v240 = vpack.c.b16 %v190, %v188
    %v241 = vpack.c.b16 %v193, %v191
    %v242 = vpack.c.b16 %v194, %v192
    %v243 = vpack.c.b16 %v197, %v195
    %v244 = vpack.c.b16 %v198, %v196
    %v245 = vpack.c.b16 %v201, %v199
    %v246 = vpack.c.b16 %v202, %v200
    %v247 = vpack.c.b16 %v205, %v203
    %v248 = vpack.c.b16 %v206, %v204
    %v249 = vpack.c.b16 %v209, %v207
    %v250 = vpack.c.b16 %v210, %v208
    %v251 = vpack.c.b16 %v213, %v211
    %v252 = vpack.c.b16 %v214, %v212
    %v253 = vpack.c.b16 %v217, %v215
    %v254 = vpack.c.b16 %v218, %v216
    %v255 = vpack.c.b16 %v221, %v219
    %v256 = vpack.c.b16 %v222, %v220
    %v257 = vpack.c.b16 %v225, %v223
    %v258 = vpack.c.b16 %v226, %v224
    %291 = vmatpush.bf16.msra.mxu0 %v241
    %292 = vmatpush.bf16.msra.mxu0 %v239
    %293 = vmatpush.bf16.msra.mxu0 %v237
    %294 = vmatpush.bf16.msra.mxu0 %v235
    %295 = vmatpush.bf16.msra.mxu0 %v233
    %296 = vmatpush.bf16.msra.mxu0 %v231
    %297 = vmatpush.bf16.msra.mxu0 %v229
    %298 = vmatpush.bf16.msra.mxu0 %v227
    %299 = vmatmul.bf16.gmra.mxu0 %v123
    %v300 = vpop.f32.mrf.mxu0
    %v301 = vadd.f32 %v107, %v300
    %v302 = vpop.f32.mrf.mxu0
    %v303 = vadd.f32 %v109, %v302
    %304 = vdwg.mxu0
    %305 = vmatpush.bf16.msra.mxu0 %v257
    %306 = vmatpush.bf16.msra.mxu0 %v255
    %307 = vmatpush.bf16.msra.mxu0 %v253
    %308 = vmatpush.bf16.msra.mxu0 %v251
    %309 = vmatpush.bf16.msra.mxu0 %v249
    %310 = vmatpush.bf16.msra.mxu0 %v247
    %311 = vmatpush.bf16.msra.mxu0 %v245
    %312 = vmatpush.bf16.msra.mxu0 %v243
    %313 = vmatmul.bf16.gmra.mxu0 %v129
    %v314 = vpop.f32.mrf.mxu0
    %v315 = vadd.f32 %v301, %v314
    %v316 = vpop.f32.mrf.mxu0
    %v317 = vadd.f32 %v303, %v316
    %318 = vdwg.mxu0
    %319 = vmatpush.bf16.msra.mxu0 %v242
    %320 = vmatpush.bf16.msra.mxu0 %v240
    %321 = vmatpush.bf16.msra.mxu0 %v238
    %322 = vmatpush.bf16.msra.mxu0 %v236
    %323 = vmatpush.bf16.msra.mxu0 %v234
    %324 = vmatpush.bf16.msra.mxu0 %v232
    %325 = vmatpush.bf16.msra.mxu0 %v230
    %326 = vmatpush.bf16.msra.mxu0 %v228
    %327 = vmatmul.bf16.gmra.mxu0 %v123
    %v328 = vpop.f32.mrf.mxu0
    %v329 = vadd.f32 %v108, %v328
    %v330 = vpop.f32.mrf.mxu0
    %v331 = vadd.f32 %v110, %v330
    %332 = vdwg.mxu0
    %333 = vmatpush.bf16.msra.mxu0 %v258
    %334 = vmatpush.bf16.msra.mxu0 %v256
    %335 = vmatpush.bf16.msra.mxu0 %v254
    %336 = vmatpush.bf16.msra.mxu0 %v252
    %337 = vmatpush.bf16.msra.mxu0 %v250
    %338 = vmatpush.bf16.msra.mxu0 %v248
    %339 = vmatpush.bf16.msra.mxu0 %v246
    %340 = vmatpush.bf16.msra.mxu0 %v244
    %341 = vmatmul.bf16.gmra.mxu0 %v129
    %v342 = vpop.f32.mrf.mxu0
    %v343 = vadd.f32 %v329, %v342
    %v344 = vpop.f32.mrf.mxu0
    %v345 = vadd.f32 %v331, %v344
    %346 = vdwg.mxu0
    %v347 = vpack.c.bf16 %v343, %v315
    %v348 = vpack.c.bf16 %v345, %v317
    %v351 = vunpack.c.l.b16 %v347
    %v352 = vunpack.c.h.b16 %v347
    %v353 = vunpack.c.l.b16 %v348
    %v354 = vunpack.c.h.b16 %v348
    %v355 = vpack.c.b16 %v353, %v351
    %v356 = vpack.c.b16 %v354, %v352
    %v391 = vunpack.c.l.b16 %v75
    %v392 = vunpack.c.l.b16 %v76
    %v393 = vunpack.c.l.b16 %v77
    %v394 = vunpack.c.l.b16 %v78
    %v395 = vunpack.c.l.b16 %v79
    %v396 = vunpack.c.l.b16 %v80
    %v397 = vunpack.c.l.b16 %v81
    %v398 = vunpack.c.l.b16 %v82
    %v399 = vunpack.c.l.b16 %v83
    %v400 = vunpack.c.l.b16 %v84
    %v401 = vunpack.c.l.b16 %v85
    %v402 = vunpack.c.l.b16 %v86
    %v403 = vunpack.c.l.b16 %v87
    %v404 = vunpack.c.l.b16 %v88
    %v405 = vunpack.c.l.b16 %v89
    %v406 = vunpack.c.l.b16 %v90
    %v407 = vunpack.c.l.b16 %v91
    %v408 = vunpack.c.l.b16 %v92
    %v409 = vunpack.c.l.b16 %v93
    %v410 = vunpack.c.l.b16 %v94
    %v411 = vunpack.c.l.b16 %v95
    %v412 = vunpack.c.l.b16 %v96
    %v413 = vunpack.c.l.b16 %v97
    %v414 = vunpack.c.l.b16 %v98
    %v415 = vunpack.c.l.b16 %v99
    %v416 = vunpack.c.l.b16 %v100
    %v417 = vunpack.c.l.b16 %v101
    %v418 = vunpack.c.l.b16 %v102
    %v419 = vunpack.c.l.b16 %v103
    %v420 = vunpack.c.l.b16 %v104
    %v421 = vunpack.c.l.b16 %v105
    %v422 = vunpack.c.l.b16 %v106
    %v423 = vpack.c.b16 %v392, %v391
    %v424 = vpack.c.b16 %v394, %v393
    %v425 = vpack.c.b16 %v396, %v395
    %v426 = vpack.c.b16 %v398, %v397
    %v427 = vpack.c.b16 %v400, %v399
    %v428 = vpack.c.b16 %v402, %v401
    %v429 = vpack.c.b16 %v404, %v403
    %v430 = vpack.c.b16 %v406, %v405
    %v431 = vpack.c.b16 %v408, %v407
    %v432 = vpack.c.b16 %v410, %v409
    %v433 = vpack.c.b16 %v412, %v411
    %v434 = vpack.c.b16 %v414, %v413
    %v435 = vpack.c.b16 %v416, %v415
    %v436 = vpack.c.b16 %v418, %v417
    %v437 = vpack.c.b16 %v420, %v419
    %v438 = vpack.c.b16 %v422, %v421
    %455 = vmatpush.bf16.msra.mxu0 %v430
    %456 = vmatpush.bf16.msra.mxu0 %v429
    %457 = vmatpush.bf16.msra.mxu0 %v428
    %458 = vmatpush.bf16.msra.mxu0 %v427
    %459 = vmatpush.bf16.msra.mxu0 %v426
    %460 = vmatpush.bf16.msra.mxu0 %v425
    %461 = vmatpush.bf16.msra.mxu0 %v424
    %462 = vmatpush.bf16.msra.mxu0 %v423
    %463 = vmatmul.bf16.gmra.mxu0 %v355
    %v464 = vpop.f32.mrf.mxu0
    %v465 = vadd.f32 %v111, %v464
    %v466 = vpop.f32.mrf.mxu0
    %v467 = vadd.f32 %v112, %v466
    %468 = vdwg.mxu0
    %469 = vmatpush.bf16.msra.mxu0 %v438
    %470 = vmatpush.bf16.msra.mxu0 %v437
    %471 = vmatpush.bf16.msra.mxu0 %v436
    %472 = vmatpush.bf16.msra.mxu0 %v435
    %473 = vmatpush.bf16.msra.mxu0 %v434
    %474 = vmatpush.bf16.msra.mxu0 %v433
    %475 = vmatpush.bf16.msra.mxu0 %v432
    %476 = vmatpush.bf16.msra.mxu0 %v431
    %477 = vmatmul.bf16.gmra.mxu0 %v356
    %v478 = vpop.f32.mrf.mxu0
    %v479 = vadd.f32 %v465, %v478
    %v480 = vpop.f32.mrf.mxu0
    %v481 = vadd.f32 %v467, %v480
    %482 = vdwg.mxu0
    %483 = vmax.xlane.f32.xlu0 %v479
    %v484 = vpop.xlane.xlu0 %483
    %485 = vmax.xlane.f32.xlu0 %v481
    %v486 = vpop.xlane.xlu0 %485
    %v487 = vsub.f32 %v479, %v484
    %v488 = vsub.f32 %v481, %v486
    %v489 = vmul.f32 %v487, 1.442695
    %v490 = vpow.pop %v489
    %v491 = vmul.f32 %v488, 1.442695
    %v492 = vpow.pop %v491
    %493 = vadd.xlane.f32.xlu0 %v490
    %v494 = vpop.xlane.xlu0 %493
    %495 = vadd.xlane.f32.xlu0 %v492
    %v496 = vpop.xlane.xlu0 %495
    %v497 = vlog2.pop %v494
    %v498 = vmul.f32 %v497, 0.6931472
    %v499 = vlog2.pop %v496
    %v500 = vmul.f32 %v499, 0.6931472
    %v501 = vsub.f32 %v487, %v498
    %v502 = vsub.f32 %v488, %v500
    %503 = vst [vmem:[#allocation5] sm:$0xff] %v501
    %504 = vst [vmem:[#allocation5 + $0x8] sm:$0xff] %v502
    %s505 = scalar_lea.vmem %s0, 8
    %v506 = vld [vmem:[%s505] sm:$0xf]
    %v507 = vld [vmem:[%s505 + $0x4] sm:$0xf]
    %v510 = vunpack.c.l.b16 %v506
    %v511 = vunpack.c.l.b16 %v507
    %v512 = vpack.c.b16 %v511, %v510
    %514 = vmatpush.bf16.msra.mxu0 %v241
    %515 = vmatpush.bf16.msra.mxu0 %v239
    %516 = vmatpush.bf16.msra.mxu0 %v237
    %517 = vmatpush.bf16.msra.mxu0 %v235
    %518 = vmatpush.bf16.msra.mxu0 %v233
    %519 = vmatpush.bf16.msra.mxu0 %v231
    %520 = vmatpush.bf16.msra.mxu0 %v229
    %521 = vmatpush.bf16.msra.mxu0 %v227
    %522 = vmatmul.bf16.gmra.mxu0 %v512
    %v523 = vpop.f32.mrf.mxu0
    %v524 = vadd.f32 %v107, %v523
    %v525 = vpop.f32.mrf.mxu0
    %v526 = vadd.f32 %v109, %v525
    %527 = vdwg.mxu0
    %528 = vmatpush.bf16.msra.mxu0 %v257
    %529 = vmatpush.bf16.msra.mxu0 %v255
    %530 = vmatpush.bf16.msra.mxu0 %v253
    %531 = vmatpush.bf16.msra.mxu0 %v251
    %532 = vmatpush.bf16.msra.mxu0 %v249
    %533 = vmatpush.bf16.msra.mxu0 %v247
    %534 = vmatpush.bf16.msra.mxu0 %v245
    %535 = vmatpush.bf16.msra.mxu0 %v243
    %536 = vmatmul.bf16.gmra.mxu0 %v355
    %v537 = vpop.f32.mrf.mxu0
    %v538 = vadd.f32 %v524, %v537
    %v539 = vpop.f32.mrf.mxu0
    %v540 = vadd.f32 %v526, %v539
    %541 = vdwg.mxu0
    %542 = vmatpush.bf16.msra.mxu0 %v242
    %543 = vmatpush.bf16.msra.mxu0 %v240
    %544 = vmatpush.bf16.msra.mxu0 %v238
    %545 = vmatpush.bf16.msra.mxu0 %v236
    %546 = vmatpush.bf16.msra.mxu0 %v234
    %547 = vmatpush.bf16.msra.mxu0 %v232
    %548 = vmatpush.bf16.msra.mxu0 %v230
    %549 = vmatpush.bf16.msra.mxu0 %v228
    %550 = vmatmul.bf16.gmra.mxu0 %v512
    %v551 = vpop.f32.mrf.mxu0
    %v552 = vadd.f32 %v108, %v551
    %v553 = vpop.f32.mrf.mxu0
    %v554 = vadd.f32 %v110, %v553
    %555 = vdwg.mxu0
    %556 = vmatpush.bf16.msra.mxu0 %v258
    %557 = vmatpush.bf16.msra.mxu0 %v256
    %558 = vmatpush.bf16.msra.mxu0 %v254
    %559 = vmatpush.bf16.msra.mxu0 %v252
    %560 = vmatpush.bf16.msra.mxu0 %v250
    %561 = vmatpush.bf16.msra.mxu0 %v248
    %562 = vmatpush.bf16.msra.mxu0 %v246
    %563 = vmatpush.bf16.msra.mxu0 %v244
    %564 = vmatmul.bf16.gmra.mxu0 %v355
    %v565 = vpop.f32.mrf.mxu0
    %v566 = vadd.f32 %v552, %v565
    %v567 = vpop.f32.mrf.mxu0
    %v568 = vadd.f32 %v554, %v567
    %569 = vdwg.mxu0
    %v570 = vpack.c.bf16 %v566, %v538
    %v571 = vpack.c.bf16 %v568, %v540
    %v574 = vunpack.c.l.b16 %v570
    %v575 = vunpack.c.h.b16 %v570
    %v576 = vunpack.c.l.b16 %v571
    %v577 = vunpack.c.h.b16 %v571
    %v578 = vpack.c.b16 %v576, %v574
    %v579 = vpack.c.b16 %v577, %v575
    %582 = vmatpush.bf16.msra.mxu0 %v430
    %583 = vmatpush.bf16.msra.mxu0 %v429
    %584 = vmatpush.bf16.msra.mxu0 %v428
    %585 = vmatpush.bf16.msra.mxu0 %v427
    %586 = vmatpush.bf16.msra.mxu0 %v426
    %587 = vmatpush.bf16.msra.mxu0 %v425
    %588 = vmatpush.bf16.msra.mxu0 %v424
    %589 = vmatpush.bf16.msra.mxu0 %v423
    %590 = vmatmul.bf16.gmra.mxu0 %v578
    %v591 = vpop.f32.mrf.mxu0
    %v592 = vadd.f32 %v111, %v591
    %v593 = vpop.f32.mrf.mxu0
    %v594 = vadd.f32 %v112, %v593
    %595 = vdwg.mxu0
    %596 = vmatpush.bf16.msra.mxu0 %v438
    %597 = vmatpush.bf16.msra.mxu0 %v437
    %598 = vmatpush.bf16.msra.mxu0 %v436
    %599 = vmatpush.bf16.msra.mxu0 %v435
    %600 = vmatpush.bf16.msra.mxu0 %v434
    %601 = vmatpush.bf16.msra.mxu0 %v433
    %602 = vmatpush.bf16.msra.mxu0 %v432
    %603 = vmatpush.bf16.msra.mxu0 %v431
    %604 = vmatmul.bf16.gmra.mxu0 %v579
    %v605 = vpop.f32.mrf.mxu0
    %v606 = vadd.f32 %v592, %v605
    %v607 = vpop.f32.mrf.mxu0
    %v608 = vadd.f32 %v594, %v607
    %609 = vdwg.mxu0
    %610 = vmax.xlane.f32.xlu0 %v606
    %v611 = vpop.xlane.xlu0 %610
    %612 = vmax.xlane.f32.xlu0 %v608
    %v613 = vpop.xlane.xlu0 %612
    %v614 = vsub.f32 %v606, %v611
    %v615 = vsub.f32 %v608, %v613
    %v616 = vmul.f32 %v614, 1.442695
    %v617 = vpow.pop %v616
    %v618 = vmul.f32 %v615, 1.442695
    %v619 = vpow.pop %v618
    %620 = vadd.xlane.f32.xlu0 %v617
    %v621 = vpop.xlane.xlu0 %620
    %622 = vadd.xlane.f32.xlu0 %v619
    %v623 = vpop.xlane.xlu0 %622
    %v624 = vlog2.pop %v621
    %v625 = vmul.f32 %v624, 0.6931472
    %v626 = vlog2.pop %v623
    %v627 = vmul.f32 %v626, 0.6931472
    %v628 = vsub.f32 %v614, %v625
    %v629 = vsub.f32 %v615, %v627
    %s630 = scalar_lea.vmem [#allocation5], 16
    %631 = vst [vmem:[%s630] sm:$0xff] %v628
    %632 = vst [vmem:[%s630 + $0x8] sm:$0xff] %v629
    %s633 = scalar_lea.vmem %s0, 16
    %v634 = vld [vmem:[%s633] sm:$0xf]
    %v635 = vld [vmem:[%s633 + $0x4] sm:$0xf]
    %v638 = vunpack.c.l.b16 %v634
    %v639 = vunpack.c.l.b16 %v635
    %v640 = vpack.c.b16 %v639, %v638
    %642 = vmatpush.bf16.msra.mxu0 %v241
    %643 = vmatpush.bf16.msra.mxu0 %v239
    %644 = vmatpush.bf16.msra.mxu0 %v237
    %645 = vmatpush.bf16.msra.mxu0 %v235
    %646 = vmatpush.bf16.msra.mxu0 %v233
    %647 = vmatpush.bf16.msra.mxu0 %v231
    %648 = vmatpush.bf16.msra.mxu0 %v229
    %649 = vmatpush.bf16.msra.mxu0 %v227
    %650 = vmatmul.bf16.gmra.mxu0 %v640
    %v651 = vpop.f32.mrf.mxu0
    %v652 = vadd.f32 %v107, %v651
    %v653 = vpop.f32.mrf.mxu0
    %v654 = vadd.f32 %v109, %v653
    %655 = vdwg.mxu0
    %656 = vmatpush.bf16.msra.mxu0 %v257
    %657 = vmatpush.bf16.msra.mxu0 %v255
    %658 = vmatpush.bf16.msra.mxu0 %v253
    %659 = vmatpush.bf16.msra.mxu0 %v251
    %660 = vmatpush.bf16.msra.mxu0 %v249
    %661 = vmatpush.bf16.msra.mxu0 %v247
    %662 = vmatpush.bf16.msra.mxu0 %v245
    %663 = vmatpush.bf16.msra.mxu0 %v243
    %664 = vmatmul.bf16.gmra.mxu0 %v578
    %v665 = vpop.f32.mrf.mxu0
    %v666 = vadd.f32 %v652, %v665
    %v667 = vpop.f32.mrf.mxu0
    %v668 = vadd.f32 %v654, %v667
    %669 = vdwg.mxu0
    %670 = vmatpush.bf16.msra.mxu0 %v242
    %671 = vmatpush.bf16.msra.mxu0 %v240
    %672 = vmatpush.bf16.msra.mxu0 %v238
    %673 = vmatpush.bf16.msra.mxu0 %v236
    %674 = vmatpush.bf16.msra.mxu0 %v234
    %675 = vmatpush.bf16.msra.mxu0 %v232
    %676 = vmatpush.bf16.msra.mxu0 %v230
    %677 = vmatpush.bf16.msra.mxu0 %v228
    %678 = vmatmul.bf16.gmra.mxu0 %v640
    %v679 = vpop.f32.mrf.mxu0
    %v680 = vadd.f32 %v108, %v679
    %v681 = vpop.f32.mrf.mxu0
    %v682 = vadd.f32 %v110, %v681
    %683 = vdwg.mxu0
    %684 = vmatpush.bf16.msra.mxu0 %v258
    %685 = vmatpush.bf16.msra.mxu0 %v256
    %686 = vmatpush.bf16.msra.mxu0 %v254
    %687 = vmatpush.bf16.msra.mxu0 %v252
    %688 = vmatpush.bf16.msra.mxu0 %v250
    %689 = vmatpush.bf16.msra.mxu0 %v248
    %690 = vmatpush.bf16.msra.mxu0 %v246
    %691 = vmatpush.bf16.msra.mxu0 %v244
    %692 = vmatmul.bf16.gmra.mxu0 %v578
    %v693 = vpop.f32.mrf.mxu0
    %v694 = vadd.f32 %v680, %v693
    %v695 = vpop.f32.mrf.mxu0
    %v696 = vadd.f32 %v682, %v695
    %697 = vdwg.mxu0
    %v698 = vpack.c.bf16 %v694, %v666
    %v699 = vpack.c.bf16 %v696, %v668
    %v702 = vunpack.c.l.b16 %v698
    %v703 = vunpack.c.h.b16 %v698
    %v704 = vunpack.c.l.b16 %v699
    %v705 = vunpack.c.h.b16 %v699
    %v706 = vpack.c.b16 %v704, %v702
    %v707 = vpack.c.b16 %v705, %v703
    %710 = vmatpush.bf16.msra.mxu0 %v430
    %711 = vmatpush.bf16.msra.mxu0 %v429
    %712 = vmatpush.bf16.msra.mxu0 %v428
    %713 = vmatpush.bf16.msra.mxu0 %v427
    %714 = vmatpush.bf16.msra.mxu0 %v426
    %715 = vmatpush.bf16.msra.mxu0 %v425
    %716 = vmatpush.bf16.msra.mxu0 %v424
    %717 = vmatpush.bf16.msra.mxu0 %v423
    %718 = vmatmul.bf16.gmra.mxu0 %v706
    %v719 = vpop.f32.mrf.mxu0
    %v720 = vadd.f32 %v111, %v719
    %v721 = vpop.f32.mrf.mxu0
    %v722 = vadd.f32 %v112, %v721
    %723 = vdwg.mxu0
    %724 = vmatpush.bf16.msra.mxu0 %v438
    %725 = vmatpush.bf16.msra.mxu0 %v437
    %726 = vmatpush.bf16.msra.mxu0 %v436
    %727 = vmatpush.bf16.msra.mxu0 %v435
    %728 = vmatpush.bf16.msra.mxu0 %v434
    %729 = vmatpush.bf16.msra.mxu0 %v433
    %730 = vmatpush.bf16.msra.mxu0 %v432
    %731 = vmatpush.bf16.msra.mxu0 %v431
    %732 = vmatmul.bf16.gmra.mxu0 %v707
    %v733 = vpop.f32.mrf.mxu0
    %v734 = vadd.f32 %v720, %v733
    %v735 = vpop.f32.mrf.mxu0
    %v736 = vadd.f32 %v722, %v735
    %737 = vdwg.mxu0
    %738 = vmax.xlane.f32.xlu0 %v734
    %v739 = vpop.xlane.xlu0 %738
    %740 = vmax.xlane.f32.xlu0 %v736
    %v741 = vpop.xlane.xlu0 %740
    %v742 = vsub.f32 %v734, %v739
    %v743 = vsub.f32 %v736, %v741
    %v744 = vmul.f32 %v742, 1.442695
    %v745 = vpow.pop %v744
    %v746 = vmul.f32 %v743, 1.442695
    %v747 = vpow.pop %v746
    %748 = vadd.xlane.f32.xlu0 %v745
    %v749 = vpop.xlane.xlu0 %748
    %750 = vadd.xlane.f32.xlu0 %v747
    %v751 = vpop.xlane.xlu0 %750
    %v752 = vlog2.pop %v749
    %v753 = vmul.f32 %v752, 0.6931472
    %v754 = vlog2.pop %v751
    %v755 = vmul.f32 %v754, 0.6931472
    %v756 = vsub.f32 %v742, %v753
    %v757 = vsub.f32 %v743, %v755
    %s758 = scalar_lea.vmem [#allocation5], 32
    %759 = vst [vmem:[%s758] sm:$0xff] %v756
    %760 = vst [vmem:[%s758 + $0x8] sm:$0xff] %v757
    %s761 = scalar_lea.vmem %s0, 24
    %v762 = vld [vmem:[%s761] sm:$0xf]
    %v763 = vld [vmem:[%s761 + $0x4] sm:$0xf]
    %v766 = vunpack.c.l.b16 %v762
    %v767 = vunpack.c.l.b16 %v763
    %v768 = vpack.c.b16 %v767, %v766
    %770 = vmatpush.bf16.msra.mxu0 %v241
    %771 = vmatpush.bf16.msra.mxu0 %v239
    %772 = vmatpush.bf16.msra.mxu0 %v237
    %773 = vmatpush.bf16.msra.mxu0 %v235
    %774 = vmatpush.bf16.msra.mxu0 %v233
    %775 = vmatpush.bf16.msra.mxu0 %v231
    %776 = vmatpush.bf16.msra.mxu0 %v229
    %777 = vmatpush.bf16.msra.mxu0 %v227
    %778 = vmatmul.bf16.gmra.mxu0 %v768
    %v779 = vpop.f32.mrf.mxu0
    %v780 = vadd.f32 %v107, %v779
    %v781 = vpop.f32.mrf.mxu0
    %v782 = vadd.f32 %v109, %v781
    %783 = vdwg.mxu0
    %784 = vmatpush.bf16.msra.mxu0 %v257
    %785 = vmatpush.bf16.msra.mxu0 %v255
    %786 = vmatpush.bf16.msra.mxu0 %v253
    %787 = vmatpush.bf16.msra.mxu0 %v251
    %788 = vmatpush.bf16.msra.mxu0 %v249
    %789 = vmatpush.bf16.msra.mxu0 %v247
    %790 = vmatpush.bf16.msra.mxu0 %v245
    %791 = vmatpush.bf16.msra.mxu0 %v243
    %792 = vmatmul.bf16.gmra.mxu0 %v706
    %v793 = vpop.f32.mrf.mxu0
    %v794 = vadd.f32 %v780, %v793
    %v795 = vpop.f32.mrf.mxu0
    %v796 = vadd.f32 %v782, %v795
    %797 = vdwg.mxu0
    %798 = vmatpush.bf16.msra.mxu0 %v242
    %799 = vmatpush.bf16.msra.mxu0 %v240
    %800 = vmatpush.bf16.msra.mxu0 %v238
    %801 = vmatpush.bf16.msra.mxu0 %v236
    %802 = vmatpush.bf16.msra.mxu0 %v234
    %803 = vmatpush.bf16.msra.mxu0 %v232
    %804 = vmatpush.bf16.msra.mxu0 %v230
    %805 = vmatpush.bf16.msra.mxu0 %v228
    %806 = vmatmul.bf16.gmra.mxu0 %v768
    %v807 = vpop.f32.mrf.mxu0
    %v808 = vadd.f32 %v108, %v807
    %v809 = vpop.f32.mrf.mxu0
    %v810 = vadd.f32 %v110, %v809
    %811 = vdwg.mxu0
    %812 = vmatpush.bf16.msra.mxu0 %v258
    %813 = vmatpush.bf16.msra.mxu0 %v256
    %814 = vmatpush.bf16.msra.mxu0 %v254
    %815 = vmatpush.bf16.msra.mxu0 %v252
    %816 = vmatpush.bf16.msra.mxu0 %v250
    %817 = vmatpush.bf16.msra.mxu0 %v248
    %818 = vmatpush.bf16.msra.mxu0 %v246
    %819 = vmatpush.bf16.msra.mxu0 %v244
    %820 = vmatmul.bf16.gmra.mxu0 %v706
    %v821 = vpop.f32.mrf.mxu0
    %v822 = vadd.f32 %v808, %v821
    %v823 = vpop.f32.mrf.mxu0
    %v824 = vadd.f32 %v810, %v823
    %825 = vdwg.mxu0
    %v826 = vpack.c.bf16 %v822, %v794
    %v827 = vpack.c.bf16 %v824, %v796
    %v830 = vunpack.c.l.b16 %v826
    %v831 = vunpack.c.h.b16 %v826
    %v832 = vunpack.c.l.b16 %v827
    %v833 = vunpack.c.h.b16 %v827
    %v834 = vpack.c.b16 %v832, %v830
    %v835 = vpack.c.b16 %v833, %v831
    %838 = vmatpush.bf16.msra.mxu0 %v430
    %839 = vmatpush.bf16.msra.mxu0 %v429
    %840 = vmatpush.bf16.msra.mxu0 %v428
    %841 = vmatpush.bf16.msra.mxu0 %v427
    %842 = vmatpush.bf16.msra.mxu0 %v426
    %843 = vmatpush.bf16.msra.mxu0 %v425
    %844 = vmatpush.bf16.msra.mxu0 %v424
    %845 = vmatpush.bf16.msra.mxu0 %v423
    %846 = vmatmul.bf16.gmra.mxu0 %v834
    %v847 = vpop.f32.mrf.mxu0
    %v848 = vadd.f32 %v111, %v847
    %v849 = vpop.f32.mrf.mxu0
    %v850 = vadd.f32 %v112, %v849
    %851 = vdwg.mxu0
    %852 = vmatpush.bf16.msra.mxu0 %v438
    %853 = vmatpush.bf16.msra.mxu0 %v437
    %854 = vmatpush.bf16.msra.mxu0 %v436
    %855 = vmatpush.bf16.msra.mxu0 %v435
    %856 = vmatpush.bf16.msra.mxu0 %v434
    %857 = vmatpush.bf16.msra.mxu0 %v433
    %858 = vmatpush.bf16.msra.mxu0 %v432
    %859 = vmatpush.bf16.msra.mxu0 %v431
    %860 = vmatmul.bf16.gmra.mxu0 %v835
    %v861 = vpop.f32.mrf.mxu0
    %v862 = vadd.f32 %v848, %v861
    %v863 = vpop.f32.mrf.mxu0
    %v864 = vadd.f32 %v850, %v863
    %865 = vdwg.mxu0
    %866 = vmax.xlane.f32.xlu0 %v862
    %v867 = vpop.xlane.xlu0 %866
    %868 = vmax.xlane.f32.xlu0 %v864
    %v869 = vpop.xlane.xlu0 %868
    %v870 = vsub.f32 %v862, %v867
    %v871 = vsub.f32 %v864, %v869
    %v872 = vmul.f32 %v870, 1.442695
    %v873 = vpow.pop %v872
    %v874 = vmul.f32 %v871, 1.442695
    %v875 = vpow.pop %v874
    %876 = vadd.xlane.f32.xlu0 %v873
    %v877 = vpop.xlane.xlu0 %876
    %878 = vadd.xlane.f32.xlu0 %v875
    %v879 = vpop.xlane.xlu0 %878
    %v880 = vlog2.pop %v877
    %v881 = vmul.f32 %v880, 0.6931472
    %v882 = vlog2.pop %v879
    %v883 = vmul.f32 %v882, 0.6931472
    %v884 = vsub.f32 %v870, %v881
    %v885 = vsub.f32 %v871, %v883
    %s886 = scalar_lea.vmem [#allocation5], 48
    %887 = vst [vmem:[%s886] sm:$0xff] %v884
    %888 = vst [vmem:[%s886 + $0x8] sm:$0xff] %v885
    %s889 = scalar_lea.vmem %s0, 32
    %v890 = vld [vmem:[%s889] sm:$0xf]
    %v891 = vld [vmem:[%s889 + $0x4] sm:$0xf]
    %v894 = vunpack.c.l.b16 %v890
    %v895 = vunpack.c.l.b16 %v891
    %v896 = vpack.c.b16 %v895, %v894
    %898 = vmatpush.bf16.msra.mxu0 %v241
    %899 = vmatpush.bf16.msra.mxu0 %v239
    %900 = vmatpush.bf16.msra.mxu0 %v237
    %901 = vmatpush.bf16.msra.mxu0 %v235
    %902 = vmatpush.bf16.msra.mxu0 %v233
    %903 = vmatpush.bf16.msra.mxu0 %v231
    %904 = vmatpush.bf16.msra.mxu0 %v229
    %905 = vmatpush.bf16.msra.mxu0 %v227
    %906 = vmatmul.bf16.gmra.mxu0 %v896
    %v907 = vpop.f32.mrf.mxu0
    %v908 = vadd.f32 %v107, %v907
    %v909 = vpop.f32.mrf.mxu0
    %v910 = vadd.f32 %v109, %v909
    %911 = vdwg.mxu0
    %912 = vmatpush.bf16.msra.mxu0 %v257
    %913 = vmatpush.bf16.msra.mxu0 %v255
    %914 = vmatpush.bf16.msra.mxu0 %v253
    %915 = vmatpush.bf16.msra.mxu0 %v251
    %916 = vmatpush.bf16.msra.mxu0 %v249
    %917 = vmatpush.bf16.msra.mxu0 %v247
    %918 = vmatpush.bf16.msra.mxu0 %v245
    %919 = vmatpush.bf16.msra.mxu0 %v243
    %920 = vmatmul.bf16.gmra.mxu0 %v834
    %v921 = vpop.f32.mrf.mxu0
    %v922 = vadd.f32 %v908, %v921
    %v923 = vpop.f32.mrf.mxu0
    %v924 = vadd.f32 %v910, %v923
    %925 = vdwg.mxu0
    %926 = vmatpush.bf16.msra.mxu0 %v242
    %927 = vmatpush.bf16.msra.mxu0 %v240
    %928 = vmatpush.bf16.msra.mxu0 %v238
    %929 = vmatpush.bf16.msra.mxu0 %v236
    %930 = vmatpush.bf16.msra.mxu0 %v234
    %931 = vmatpush.bf16.msra.mxu0 %v232
    %932 = vmatpush.bf16.msra.mxu0 %v230
    %933 = vmatpush.bf16.msra.mxu0 %v228
    %934 = vmatmul.bf16.gmra.mxu0 %v896
    %v935 = vpop.f32.mrf.mxu0
    %v936 = vadd.f32 %v108, %v935
    %v937 = vpop.f32.mrf.mxu0
    %v938 = vadd.f32 %v110, %v937
    %939 = vdwg.mxu0
    %940 = vmatpush.bf16.msra.mxu0 %v258
    %941 = vmatpush.bf16.msra.mxu0 %v256
    %942 = vmatpush.bf16.msra.mxu0 %v254
    %943 = vmatpush.bf16.msra.mxu0 %v252
    %944 = vmatpush.bf16.msra.mxu0 %v250
    %945 = vmatpush.bf16.msra.mxu0 %v248
    %946 = vmatpush.bf16.msra.mxu0 %v246
    %947 = vmatpush.bf16.msra.mxu0 %v244
    %948 = vmatmul.bf16.gmra.mxu0 %v834
    %v949 = vpop.f32.mrf.mxu0
    %v950 = vadd.f32 %v936, %v949
    %v951 = vpop.f32.mrf.mxu0
    %v952 = vadd.f32 %v938, %v951
    %953 = vdwg.mxu0
    %v954 = vpack.c.bf16 %v950, %v922
    %v955 = vpack.c.bf16 %v952, %v924
    %v958 = vunpack.c.l.b16 %v954
    %v959 = vunpack.c.h.b16 %v954
    %v960 = vunpack.c.l.b16 %v955
    %v961 = vunpack.c.h.b16 %v955
    %v962 = vpack.c.b16 %v960, %v958
    %v963 = vpack.c.b16 %v961, %v959
    %966 = vmatpush.bf16.msra.mxu0 %v430
    %967 = vmatpush.bf16.msra.mxu0 %v429
    %968 = vmatpush.bf16.msra.mxu0 %v428
    %969 = vmatpush.bf16.msra.mxu0 %v427
    %970 = vmatpush.bf16.msra.mxu0 %v426
    %971 = vmatpush.bf16.msra.mxu0 %v425
    %972 = vmatpush.bf16.msra.mxu0 %v424
    %973 = vmatpush.bf16.msra.mxu0 %v423
    %974 = vmatmul.bf16.gmra.mxu0 %v962
    %v975 = vpop.f32.mrf.mxu0
    %v976 = vadd.f32 %v111, %v975
    %v977 = vpop.f32.mrf.mxu0
    %v978 = vadd.f32 %v112, %v977
    %979 = vdwg.mxu0
    %980 = vmatpush.bf16.msra.mxu0 %v438
    %981 = vmatpush.bf16.msra.mxu0 %v437
    %982 = vmatpush.bf16.msra.mxu0 %v436
    %983 = vmatpush.bf16.msra.mxu0 %v435
    %984 = vmatpush.bf16.msra.mxu0 %v434
    %985 = vmatpush.bf16.msra.mxu0 %v433
    %986 = vmatpush.bf16.msra.mxu0 %v432
    %987 = vmatpush.bf16.msra.mxu0 %v431
    %988 = vmatmul.bf16.gmra.mxu0 %v963
    %v989 = vpop.f32.mrf.mxu0
    %v990 = vadd.f32 %v976, %v989
    %v991 = vpop.f32.mrf.mxu0
    %v992 = vadd.f32 %v978, %v991
    %993 = vdwg.mxu0
    %994 = vmax.xlane.f32.xlu0 %v990
    %v995 = vpop.xlane.xlu0 %994
    %996 = vmax.xlane.f32.xlu0 %v992
    %v997 = vpop.xlane.xlu0 %996
    %v998 = vsub.f32 %v990, %v995
    %v999 = vsub.f32 %v992, %v997
    %v1000 = vmul.f32 %v998, 1.442695
    %v1001 = vpow.pop %v1000
    %v1002 = vmul.f32 %v999, 1.442695
    %v1003 = vpow.pop %v1002
    %1004 = vadd.xlane.f32.xlu0 %v1001
    %v1005 = vpop.xlane.xlu0 %1004
    %1006 = vadd.xlane.f32.xlu0 %v1003
    %v1007 = vpop.xlane.xlu0 %1006
    %v1008 = vlog2.pop %v1005
    %v1009 = vmul.f32 %v1008, 0.6931472
    %v1010 = vlog2.pop %v1007
    %v1011 = vmul.f32 %v1010, 0.6931472
    %v1012 = vsub.f32 %v998, %v1009
    %v1013 = vsub.f32 %v999, %v1011
    %s1014 = scalar_lea.vmem [#allocation5], 64
    %1015 = vst [vmem:[%s1014] sm:$0xff] %v1012
    %1016 = vst [vmem:[%s1014 + $0x8] sm:$0xff] %v1013
    %s1017 = scalar_lea.vmem %s0, 40
    %v1018 = vld [vmem:[%s1017] sm:$0xf]
    %v1019 = vld [vmem:[%s1017 + $0x4] sm:$0xf]
    %v1022 = vunpack.c.l.b16 %v1018
    %v1023 = vunpack.c.l.b16 %v1019
    %v1024 = vpack.c.b16 %v1023, %v1022
    %1026 = vmatpush.bf16.msra.mxu0 %v241
    %1027 = vmatpush.bf16.msra.mxu0 %v239
    %1028 = vmatpush.bf16.msra.mxu0 %v237
    %1029 = vmatpush.bf16.msra.mxu0 %v235
    %1030 = vmatpush.bf16.msra.mxu0 %v233
    %1031 = vmatpush.bf16.msra.mxu0 %v231
    %1032 = vmatpush.bf16.msra.mxu0 %v229
    %1033 = vmatpush.bf16.msra.mxu0 %v227
    %1034 = vmatmul.bf16.gmra.mxu0 %v1024
    %v1035 = vpop.f32.mrf.mxu0
    %v1036 = vadd.f32 %v107, %v1035
    %v1037 = vpop.f32.mrf.mxu0
    %v1038 = vadd.f32 %v109, %v1037
    %1039 = vdwg.mxu0
    %1040 = vmatpush.bf16.msra.mxu0 %v257
    %1041 = vmatpush.bf16.msra.mxu0 %v255
    %1042 = vmatpush.bf16.msra.mxu0 %v253
    %1043 = vmatpush.bf16.msra.mxu0 %v251
    %1044 = vmatpush.bf16.msra.mxu0 %v249
    %1045 = vmatpush.bf16.msra.mxu0 %v247
    %1046 = vmatpush.bf16.msra.mxu0 %v245
    %1047 = vmatpush.bf16.msra.mxu0 %v243
    %1048 = vmatmul.bf16.gmra.mxu0 %v962
    %v1049 = vpop.f32.mrf.mxu0
    %v1050 = vadd.f32 %v1036, %v1049
    %v1051 = vpop.f32.mrf.mxu0
    %v1052 = vadd.f32 %v1038, %v1051
    %1053 = vdwg.mxu0
    %1054 = vmatpush.bf16.msra.mxu0 %v242
    %1055 = vmatpush.bf16.msra.mxu0 %v240
    %1056 = vmatpush.bf16.msra.mxu0 %v238
    %1057 = vmatpush.bf16.msra.mxu0 %v236
    %1058 = vmatpush.bf16.msra.mxu0 %v234
    %1059 = vmatpush.bf16.msra.mxu0 %v232
    %1060 = vmatpush.bf16.msra.mxu0 %v230
    %1061 = vmatpush.bf16.msra.mxu0 %v228
    %1062 = vmatmul.bf16.gmra.mxu0 %v1024
    %v1063 = vpop.f32.mrf.mxu0
    %v1064 = vadd.f32 %v108, %v1063
    %v1065 = vpop.f32.mrf.mxu0
    %v1066 = vadd.f32 %v110, %v1065
    %1067 = vdwg.mxu0
    %1068 = vmatpush.bf16.msra.mxu0 %v258
    %1069 = vmatpush.bf16.msra.mxu0 %v256
    %1070 = vmatpush.bf16.msra.mxu0 %v254
    %1071 = vmatpush.bf16.msra.mxu0 %v252
    %1072 = vmatpush.bf16.msra.mxu0 %v250
    %1073 = vmatpush.bf16.msra.mxu0 %v248
    %1074 = vmatpush.bf16.msra.mxu0 %v246
    %1075 = vmatpush.bf16.msra.mxu0 %v244
    %1076 = vmatmul.bf16.gmra.mxu0 %v962
    %v1077 = vpop.f32.mrf.mxu0
    %v1078 = vadd.f32 %v1064, %v1077
    %v1079 = vpop.f32.mrf.mxu0
    %v1080 = vadd.f32 %v1066, %v1079
    %1081 = vdwg.mxu0
    %v1082 = vpack.c.bf16 %v1078, %v1050
    %v1083 = vpack.c.bf16 %v1080, %v1052
    %v1086 = vunpack.c.l.b16 %v1082
    %v1087 = vunpack.c.h.b16 %v1082
    %v1088 = vunpack.c.l.b16 %v1083
    %v1089 = vunpack.c.h.b16 %v1083
    %v1090 = vpack.c.b16 %v1088, %v1086
    %v1091 = vpack.c.b16 %v1089, %v1087
    %1094 = vmatpush.bf16.msra.mxu0 %v430
    %1095 = vmatpush.bf16.msra.mxu0 %v429
    %1096 = vmatpush.bf16.msra.mxu0 %v428
    %1097 = vmatpush.bf16.msra.mxu0 %v427
    %1098 = vmatpush.bf16.msra.mxu0 %v426
    %1099 = vmatpush.bf16.msra.mxu0 %v425
    %1100 = vmatpush.bf16.msra.mxu0 %v424
    %1101 = vmatpush.bf16.msra.mxu0 %v423
    %1102 = vmatmul.bf16.gmra.mxu0 %v1090
    %v1103 = vpop.f32.mrf.mxu0
    %v1104 = vadd.f32 %v111, %v1103
    %v1105 = vpop.f32.mrf.mxu0
    %v1106 = vadd.f32 %v112, %v1105
    %1107 = vdwg.mxu0
    %1108 = vmatpush.bf16.msra.mxu0 %v438
    %1109 = vmatpush.bf16.msra.mxu0 %v437
    %1110 = vmatpush.bf16.msra.mxu0 %v436
    %1111 = vmatpush.bf16.msra.mxu0 %v435
    %1112 = vmatpush.bf16.msra.mxu0 %v434
    %1113 = vmatpush.bf16.msra.mxu0 %v433
    %1114 = vmatpush.bf16.msra.mxu0 %v432
    %1115 = vmatpush.bf16.msra.mxu0 %v431
    %1116 = vmatmul.bf16.gmra.mxu0 %v1091
    %v1117 = vpop.f32.mrf.mxu0
    %v1118 = vadd.f32 %v1104, %v1117
    %v1119 = vpop.f32.mrf.mxu0
    %v1120 = vadd.f32 %v1106, %v1119
    %1121 = vdwg.mxu0
    %1122 = vmax.xlane.f32.xlu0 %v1118
    %v1123 = vpop.xlane.xlu0 %1122
    %1124 = vmax.xlane.f32.xlu0 %v1120
    %v1125 = vpop.xlane.xlu0 %1124
    %v1126 = vsub.f32 %v1118, %v1123
    %v1127 = vsub.f32 %v1120, %v1125
    %v1128 = vmul.f32 %v1126, 1.442695
    %v1129 = vpow.pop %v1128
    %v1130 = vmul.f32 %v1127, 1.442695
    %v1131 = vpow.pop %v1130
    %1132 = vadd.xlane.f32.xlu0 %v1129
    %v1133 = vpop.xlane.xlu0 %1132
    %1134 = vadd.xlane.f32.xlu0 %v1131
    %v1135 = vpop.xlane.xlu0 %1134
    %v1136 = vlog2.pop %v1133
    %v1137 = vmul.f32 %v1136, 0.6931472
    %v1138 = vlog2.pop %v1135
    %v1139 = vmul.f32 %v1138, 0.6931472
    %v1140 = vsub.f32 %v1126, %v1137
    %v1141 = vsub.f32 %v1127, %v1139
    %s1142 = scalar_lea.vmem [#allocation5], 80
    %1143 = vst [vmem:[%s1142] sm:$0xff] %v1140
    %1144 = vst [vmem:[%s1142 + $0x8] sm:$0xff] %v1141
    %s1145 = scalar_lea.vmem %s0, 48
    %v1146 = vld [vmem:[%s1145] sm:$0xf]
    %v1147 = vld [vmem:[%s1145 + $0x4] sm:$0xf]
    %v1150 = vunpack.c.l.b16 %v1146
    %v1151 = vunpack.c.l.b16 %v1147
    %v1152 = vpack.c.b16 %v1151, %v1150
    %1154 = vmatpush.bf16.msra.mxu0 %v241
    %1155 = vmatpush.bf16.msra.mxu0 %v239
    %1156 = vmatpush.bf16.msra.mxu0 %v237
    %1157 = vmatpush.bf16.msra.mxu0 %v235
    %1158 = vmatpush.bf16.msra.mxu0 %v233
    %1159 = vmatpush.bf16.msra.mxu0 %v231
    %1160 = vmatpush.bf16.msra.mxu0 %v229
    %1161 = vmatpush.bf16.msra.mxu0 %v227
    %1162 = vmatmul.bf16.gmra.mxu0 %v1152
    %v1163 = vpop.f32.mrf.mxu0
    %v1164 = vadd.f32 %v107, %v1163
    %v1165 = vpop.f32.mrf.mxu0
    %v1166 = vadd.f32 %v109, %v1165
    %1167 = vdwg.mxu0
    %1168 = vmatpush.bf16.msra.mxu0 %v257
    %1169 = vmatpush.bf16.msra.mxu0 %v255
    %1170 = vmatpush.bf16.msra.mxu0 %v253
    %1171 = vmatpush.bf16.msra.mxu0 %v251
    %1172 = vmatpush.bf16.msra.mxu0 %v249
    %1173 = vmatpush.bf16.msra.mxu0 %v247
    %1174 = vmatpush.bf16.msra.mxu0 %v245
    %1175 = vmatpush.bf16.msra.mxu0 %v243
    %1176 = vmatmul.bf16.gmra.mxu0 %v1090
    %v1177 = vpop.f32.mrf.mxu0
    %v1178 = vadd.f32 %v1164, %v1177
    %v1179 = vpop.f32.mrf.mxu0
    %v1180 = vadd.f32 %v1166, %v1179
    %1181 = vdwg.mxu0
    %1182 = vmatpush.bf16.msra.mxu0 %v242
    %1183 = vmatpush.bf16.msra.mxu0 %v240
    %1184 = vmatpush.bf16.msra.mxu0 %v238
    %1185 = vmatpush.bf16.msra.mxu0 %v236
    %1186 = vmatpush.bf16.msra.mxu0 %v234
    %1187 = vmatpush.bf16.msra.mxu0 %v232
    %1188 = vmatpush.bf16.msra.mxu0 %v230
    %1189 = vmatpush.bf16.msra.mxu0 %v228
    %1190 = vmatmul.bf16.gmra.mxu0 %v1152
    %v1191 = vpop.f32.mrf.mxu0
    %v1192 = vadd.f32 %v108, %v1191
    %v1193 = vpop.f32.mrf.mxu0
    %v1194 = vadd.f32 %v110, %v1193
    %1195 = vdwg.mxu0
    %1196 = vmatpush.bf16.msra.mxu0 %v258
    %1197 = vmatpush.bf16.msra.mxu0 %v256
    %1198 = vmatpush.bf16.msra.mxu0 %v254
    %1199 = vmatpush.bf16.msra.mxu0 %v252
    %1200 = vmatpush.bf16.msra.mxu0 %v250
    %1201 = vmatpush.bf16.msra.mxu0 %v248
    %1202 = vmatpush.bf16.msra.mxu0 %v246
    %1203 = vmatpush.bf16.msra.mxu0 %v244
    %1204 = vmatmul.bf16.gmra.mxu0 %v1090
    %v1205 = vpop.f32.mrf.mxu0
    %v1206 = vadd.f32 %v1192, %v1205
    %v1207 = vpop.f32.mrf.mxu0
    %v1208 = vadd.f32 %v1194, %v1207
    %1209 = vdwg.mxu0
    %v1210 = vpack.c.bf16 %v1206, %v1178
    %v1211 = vpack.c.bf16 %v1208, %v1180
    %v1214 = vunpack.c.l.b16 %v1210
    %v1215 = vunpack.c.h.b16 %v1210
    %v1216 = vunpack.c.l.b16 %v1211
    %v1217 = vunpack.c.h.b16 %v1211
    %v1218 = vpack.c.b16 %v1216, %v1214
    %v1219 = vpack.c.b16 %v1217, %v1215
    %1222 = vmatpush.bf16.msra.mxu0 %v430
    %1223 = vmatpush.bf16.msra.mxu0 %v429
    %1224 = vmatpush.bf16.msra.mxu0 %v428
    %1225 = vmatpush.bf16.msra.mxu0 %v427
    %1226 = vmatpush.bf16.msra.mxu0 %v426
    %1227 = vmatpush.bf16.msra.mxu0 %v425
    %1228 = vmatpush.bf16.msra.mxu0 %v424
    %1229 = vmatpush.bf16.msra.mxu0 %v423
    %1230 = vmatmul.bf16.gmra.mxu0 %v1218
    %v1231 = vpop.f32.mrf.mxu0
    %v1232 = vadd.f32 %v111, %v1231
    %v1233 = vpop.f32.mrf.mxu0
    %v1234 = vadd.f32 %v112, %v1233
    %1235 = vdwg.mxu0
    %1236 = vmatpush.bf16.msra.mxu0 %v438
    %1237 = vmatpush.bf16.msra.mxu0 %v437
    %1238 = vmatpush.bf16.msra.mxu0 %v436
    %1239 = vmatpush.bf16.msra.mxu0 %v435
    %1240 = vmatpush.bf16.msra.mxu0 %v434
    %1241 = vmatpush.bf16.msra.mxu0 %v433
    %1242 = vmatpush.bf16.msra.mxu0 %v432
    %1243 = vmatpush.bf16.msra.mxu0 %v431
    %1244 = vmatmul.bf16.gmra.mxu0 %v1219
    %v1245 = vpop.f32.mrf.mxu0
    %v1246 = vadd.f32 %v1232, %v1245
    %v1247 = vpop.f32.mrf.mxu0
    %v1248 = vadd.f32 %v1234, %v1247
    %1249 = vdwg.mxu0
    %1250 = vmax.xlane.f32.xlu0 %v1246
    %v1251 = vpop.xlane.xlu0 %1250
    %1252 = vmax.xlane.f32.xlu0 %v1248
    %v1253 = vpop.xlane.xlu0 %1252
    %v1254 = vsub.f32 %v1246, %v1251
    %v1255 = vsub.f32 %v1248, %v1253
    %v1256 = vmul.f32 %v1254, 1.442695
    %v1257 = vpow.pop %v1256
    %v1258 = vmul.f32 %v1255, 1.442695
    %v1259 = vpow.pop %v1258
    %1260 = vadd.xlane.f32.xlu0 %v1257
    %v1261 = vpop.xlane.xlu0 %1260
    %1262 = vadd.xlane.f32.xlu0 %v1259
    %v1263 = vpop.xlane.xlu0 %1262
    %v1264 = vlog2.pop %v1261
    %v1265 = vmul.f32 %v1264, 0.6931472
    %v1266 = vlog2.pop %v1263
    %v1267 = vmul.f32 %v1266, 0.6931472
    %v1268 = vsub.f32 %v1254, %v1265
    %v1269 = vsub.f32 %v1255, %v1267
    %s1270 = scalar_lea.vmem [#allocation5], 96
    %1271 = vst [vmem:[%s1270] sm:$0xff] %v1268
    %1272 = vst [vmem:[%s1270 + $0x8] sm:$0xff] %v1269
    %s1273 = scalar_lea.vmem %s0, 56
    %v1274 = vld [vmem:[%s1273] sm:$0xf]
    %v1275 = vld [vmem:[%s1273 + $0x4] sm:$0xf]
    %v1278 = vunpack.c.l.b16 %v1274
    %v1279 = vunpack.c.l.b16 %v1275
    %v1280 = vpack.c.b16 %v1279, %v1278
    %1282 = vmatpush.bf16.msra.mxu0 %v241
    %1283 = vmatpush.bf16.msra.mxu0 %v239
    %1284 = vmatpush.bf16.msra.mxu0 %v237
    %1285 = vmatpush.bf16.msra.mxu0 %v235
    %1286 = vmatpush.bf16.msra.mxu0 %v233
    %1287 = vmatpush.bf16.msra.mxu0 %v231
    %1288 = vmatpush.bf16.msra.mxu0 %v229
    %1289 = vmatpush.bf16.msra.mxu0 %v227
    %1290 = vmatmul.bf16.gmra.mxu0 %v1280
    %v1291 = vpop.f32.mrf.mxu0
    %v1292 = vadd.f32 %v107, %v1291
    %v1293 = vpop.f32.mrf.mxu0
    %v1294 = vadd.f32 %v109, %v1293
    %1295 = vdwg.mxu0
    %1296 = vmatpush.bf16.msra.mxu0 %v257
    %1297 = vmatpush.bf16.msra.mxu0 %v255
    %1298 = vmatpush.bf16.msra.mxu0 %v253
    %1299 = vmatpush.bf16.msra.mxu0 %v251
    %1300 = vmatpush.bf16.msra.mxu0 %v249
    %1301 = vmatpush.bf16.msra.mxu0 %v247
    %1302 = vmatpush.bf16.msra.mxu0 %v245
    %1303 = vmatpush.bf16.msra.mxu0 %v243
    %1304 = vmatmul.bf16.gmra.mxu0 %v1218
    %v1305 = vpop.f32.mrf.mxu0
    %v1306 = vadd.f32 %v1292, %v1305
    %v1307 = vpop.f32.mrf.mxu0
    %v1308 = vadd.f32 %v1294, %v1307
    %1309 = vdwg.mxu0
    %1310 = vmatpush.bf16.msra.mxu0 %v242
    %1311 = vmatpush.bf16.msra.mxu0 %v240
    %1312 = vmatpush.bf16.msra.mxu0 %v238
    %1313 = vmatpush.bf16.msra.mxu0 %v236
    %1314 = vmatpush.bf16.msra.mxu0 %v234
    %1315 = vmatpush.bf16.msra.mxu0 %v232
    %1316 = vmatpush.bf16.msra.mxu0 %v230
    %1317 = vmatpush.bf16.msra.mxu0 %v228
    %1318 = vmatmul.bf16.gmra.mxu0 %v1280
    %v1319 = vpop.f32.mrf.mxu0
    %v1320 = vadd.f32 %v108, %v1319
    %v1321 = vpop.f32.mrf.mxu0
    %v1322 = vadd.f32 %v110, %v1321
    %1323 = vdwg.mxu0
    %1324 = vmatpush.bf16.msra.mxu0 %v258
    %1325 = vmatpush.bf16.msra.mxu0 %v256
    %1326 = vmatpush.bf16.msra.mxu0 %v254
    %1327 = vmatpush.bf16.msra.mxu0 %v252
    %1328 = vmatpush.bf16.msra.mxu0 %v250
    %1329 = vmatpush.bf16.msra.mxu0 %v248
    %1330 = vmatpush.bf16.msra.mxu0 %v246
    %1331 = vmatpush.bf16.msra.mxu0 %v244
    %1332 = vmatmul.bf16.gmra.mxu0 %v1218
    %v1333 = vpop.f32.mrf.mxu0
    %v1334 = vadd.f32 %v1320, %v1333
    %v1335 = vpop.f32.mrf.mxu0
    %v1336 = vadd.f32 %v1322, %v1335
    %1337 = vdwg.mxu0
    %v1338 = vpack.c.bf16 %v1308, %v1306
    %v1339 = vpack.c.bf16 %v1336, %v1334
    %1340 = vmatpush.bf16.msra.mxu0 %v430
    %1341 = vmatpush.bf16.msra.mxu0 %v429
    %1342 = vmatpush.bf16.msra.mxu0 %v428
    %1343 = vmatpush.bf16.msra.mxu0 %v427
    %1344 = vmatpush.bf16.msra.mxu0 %v426
    %1345 = vmatpush.bf16.msra.mxu0 %v425
    %1346 = vmatpush.bf16.msra.mxu0 %v424
    %1347 = vmatpush.bf16.msra.mxu0 %v423
    %1348 = vmatmul.bf16.gmra.mxu0 %v1338
    %v1349 = vpop.f32.mrf.mxu0
    %v1350 = vadd.f32 %v111, %v1349
    %v1351 = vpop.f32.mrf.mxu0
    %v1352 = vadd.f32 %v112, %v1351
    %1353 = vdwg.mxu0
    %1354 = vmatpush.bf16.msra.mxu0 %v438
    %1355 = vmatpush.bf16.msra.mxu0 %v437
    %1356 = vmatpush.bf16.msra.mxu0 %v436
    %1357 = vmatpush.bf16.msra.mxu0 %v435
    %1358 = vmatpush.bf16.msra.mxu0 %v434
    %1359 = vmatpush.bf16.msra.mxu0 %v433
    %1360 = vmatpush.bf16.msra.mxu0 %v432
    %1361 = vmatpush.bf16.msra.mxu0 %v431
    %1362 = vmatmul.bf16.gmra.mxu0 %v1339
    %v1363 = vpop.f32.mrf.mxu0
    %v1364 = vadd.f32 %v1350, %v1363
    %v1365 = vpop.f32.mrf.mxu0
    %v1366 = vadd.f32 %v1352, %v1365
    %1367 = vdwg.mxu0
    %1368 = vmax.xlane.f32.xlu0 %v1364
    %v1369 = vpop.xlane.xlu0 %1368
    %1370 = vmax.xlane.f32.xlu0 %v1366
    %v1371 = vpop.xlane.xlu0 %1370
    %v1372 = vsub.f32 %v1364, %v1369
    %v1373 = vsub.f32 %v1366, %v1371
    %v1374 = vmul.f32 %v1372, 1.442695
    %v1375 = vpow.pop %v1374
    %v1376 = vmul.f32 %v1373, 1.442695
    %v1377 = vpow.pop %v1376
    %1378 = vadd.xlane.f32.xlu0 %v1375
    %v1379 = vpop.xlane.xlu0 %1378
    %1380 = vadd.xlane.f32.xlu0 %v1377
    %v1381 = vpop.xlane.xlu0 %1380
    %v1382 = vlog2.pop %v1379
    %v1383 = vmul.f32 %v1382, 0.6931472
    %v1384 = vlog2.pop %v1381
    %v1385 = vmul.f32 %v1384, 0.6931472
    %v1386 = vsub.f32 %v1372, %v1383
    %v1387 = vsub.f32 %v1373, %v1385
    %s1388 = scalar_lea.vmem [#allocation5], 112
    %1389 = vst [vmem:[%s1388] sm:$0xff] %v1386
    %1390 = vst [vmem:[%s1388 + $0x8] sm:$0xff] %v1387
    %1391 = vst [vmem:[#allocation6] sm:$0xff] %v1306
    %1392 = vst [vmem:[#allocation6 + $0x8] sm:$0xff] %v1308
    // Predicated region
    $region30: #{rnn_forward_seq.1} parent=1 // pred_check
      _
    $region31: #{rnn_forward_seq.1} parent=1 // pred_check_branch
      %1394 = sbr.rel (0) target = $region33
    $region32: #{rnn_forward_seq.1} parent=1 // pred_region
      %1396 = vsyncadd [#allocation4], 0
      %s1397 = sshll.u32 [#allocation5], 4
      %s1398 = int_to_ptr.vmem [resolvable:$true] %s1397
      %s1399 = sshll.u32 %s6, 4
      %s1400 = int_to_ptr.hbm [resolvable:$true] %s1399
      %1405 = dma.vmem_to_hbm [thread:$0]  %s1398, 2048, %s1400, [#allocation4], 128, 128, 8
    $region33: #{rnn_forward_seq.1} parent=1 // pred_fallthru
      _
    // Predicated region
    $region34: #{rnn_forward_seq.1} parent=1 // pred_check
      _
    $region35: #{rnn_forward_seq.1} parent=1 // pred_check_branch
      %1407 = sbr.rel (0) target = $region37
    $region36: #{rnn_forward_seq.1} parent=1 // pred_region
      %1409 = vsyncadd [#allocation7], 0
      %s1410 = sshll.u32 [#allocation6], 4
      %s1411 = int_to_ptr.vmem [resolvable:$true] %s1410
      %s1412 = sshll.u32 %s7, 4
      %s1413 = int_to_ptr.hbm [resolvable:$true] %s1412
      %1418 = dma.vmem_to_hbm [thread:$0]  %s1411, 256, %s1413, [#allocation7], 128, 128, 8
    $region37: #{rnn_forward_seq.1} parent=1 // pred_fallthru
      _
    // Predicated region
    $region38: #{rnn_forward_seq.1} parent=1 // pred_check
      _
    $region39: #{rnn_forward_seq.1} parent=1 // pred_check_branch
      %1420 = sbr.rel (0) target = $region41
    $region40: #{rnn_forward_seq.1} parent=1 // pred_region
      %1422 = dma.done [#allocation4], 2048
    $region41: #{rnn_forward_seq.1} parent=1 // pred_fallthru
      _
    // Predicated region
    $region42: #{rnn_forward_seq.1} parent=1 // pred_check
      _
    $region43: #{rnn_forward_seq.1} parent=1 // pred_check_branch
      %1424 = sbr.rel (0) target = $region45
    $region44: #{rnn_forward_seq.1} parent=1 // pred_region
      %1426 = dma.done [#allocation7], 256
    $region45: #{rnn_forward_seq.1} parent=1 // pred_fallthru
      _
    %1427 = vsyncpa [#allocation3], 1
    %1428 = vsyncpa [#allocation4], 1
    %1429 = vsyncpa [#allocation7], 1

</llo_original>
